<compile_context>
chip_gen: v6e
topology: v6e:2x2x1
jax: 0.10.0
libtpu: 0.0.40
codegen_flags: <defaults>
</compile_context>

<pallas_src>
import functools

import jax
import jax.numpy as jnp
from jax.experimental import pallas as pl
from jax.experimental.pallas import tpu as pltpu

_EPS = 1e-5
_LANE = 128
_SUBLANE = 8


def _discriminator_kernel(
    x_ref,
    w1_ref, b1_ref, g1_ref, be1_ref,
    w2_ref, b2_ref, g2_ref, be2_ref,
    w3_ref, b3_ref, g3_ref, be3_ref,
    w4_ref, b4_ref,
    o_ref,
    *, h_real,
):
    """One batch tile of the fully fused forward pass."""
    inv_h = 1.0 / float(h_real)  # normalize LN stats by the REAL feature count, not padded

    def linear_ln_relu(h_bf16, w_ref, b_ref, g_ref, be_ref):
        # Linear: (TB, Hp) @ (Hp, Hp) + (1, Hp).  bf16 MXU inputs, f32 accumulation.
        y = jnp.dot(h_bf16, w_ref[...], preferred_element_type=jnp.float32) + b_ref[...]
        # One-pass LayerNorm statistics (single pair of cross-lane reductions).
        # Padded lanes of y are exactly 0, so sums over Hp equal sums over the real H.
        s = jnp.sum(y, axis=-1, keepdims=True)
        s2 = jnp.sum(y * y, axis=-1, keepdims=True)
        mu = s * inv_h
        var = jnp.maximum(s2 * inv_h - mu * mu, 0.0)
        y_hat = (y - mu) * jax.lax.rsqrt(var + _EPS)
        # gamma is zero-padded, so padded lanes collapse back to 0 before the next layer.
        y_hat = y_hat * g_ref[...] + be_ref[...]
        # Carry the inter-layer activation in bf16: half the live VMEM/vreg pressure and it is
        # exactly what the next MXU matmul consumes anyway.
        return jnp.maximum(y_hat, 0.0).astype(jnp.bfloat16)

    h = linear_ln_relu(x_ref[...], w1_ref, b1_ref, g1_ref, be1_ref)   # x already bf16
    h = linear_ln_relu(h, w2_ref, b2_ref, g2_ref, be2_ref)
    h = linear_ln_relu(h, w3_ref, b3_ref, g3_ref, be3_ref)

    # Final (H -> 1) projection: VPU multiply + XLU lane reduce.  w4 padded lanes are zero.
    logit = jnp.sum(h * w4_ref[...], axis=-1, keepdims=True) + b4_ref[0]   # (TB, 1) f32
    sig = jax.nn.sigmoid(logit)
    # Lane-dense store: broadcast the logit column across 128 lanes -> full unmasked tile store.
    o_ref[...] = jnp.broadcast_to(sig, o_ref.shape).astype(o_ref.dtype)


def _round_up(n, m):
    return ((n + m - 1) // m) * m


def _pad2d(a, rows, cols):
    out = jnp.zeros((rows, cols), a.dtype)
    return out.at[: a.shape[0], : a.shape[1]].set(a)


def prepare_params(params):
    """One-time padding + bf16 cast of the weights (hoisted out of the per-forward path)."""
    H = params["w1"].shape[0]
    Hp = _round_up(max(H, _LANE), _LANE)

    def wpad(w):  # (in, out) weights, zero-padded, bf16 for the MXU
        return _pad2d(w, Hp, Hp).astype(jnp.bfloat16)

    def vpad(v):  # per-feature rows, zero-padded f32 (zero gamma keeps padded lanes at 0)
        return _pad2d(v.astype(jnp.float32).reshape(1, -1), 1, Hp)

    return {
        "H": H, "Hp": Hp,
        "w1": wpad(params["w1"]), "b1": vpad(params["b1"]),
        "g1": vpad(params["g1"]), "be1": vpad(params["be1"]),
        "w2": wpad(params["w2"]), "b2": vpad(params["b2"]),
        "g2": vpad(params["g2"]), "be2": vpad(params["be2"]),
        "w3": wpad(params["w3"]), "b3": vpad(params["b3"]),
        "g3": vpad(params["g3"]), "be3": vpad(params["be3"]),
        "w4": vpad(params["w4"].reshape(1, H)),
        "b4": params["b4"].reshape(1).astype(jnp.float32),   # scalar, lives in SMEM
    }


def _vmem_capacity_bytes():
    try:
        return int(pltpu.get_tpu_info().vmem_capacity_bytes)   # 128 MiB v5e/v6e, 64 MiB v7x
    except Exception:
        return 64 << 20


def _pick_block_b(B, Hp, vmem_cap):
    """Generation/shape-aware batch tile."""
    if B <= 32:
        # Tiny batch: only sublane/bf16-pack alignment, no 128-row padding (16x less waste).
        return _round_up(max(B, 1), 16)

    resident = 3 * Hp * Hp * 2 + 16 * Hp * 4          # single-buffered bf16 weights + vectors

    def act_bytes(t):
        # double-buffered bf16 x + live f32 y / temps + bf16 h + double-buffered out tile
        return 2 * t * Hp * 2 + t * Hp * 10 + 2 * t * _LANE * 4

    tb = 512
    # Keep resident weights + per-tile working set comfortably inside VMEM (v7x: 64 MiB/TC).
    while tb > 128 and resident + act_bytes(tb) > int(0.70 * vmem_cap):
        tb //= 2
    # At least 2 grid steps whenever the batch allows it (shards across v7x's 2 TensorCores).
    while tb > 64 and pl.cdiv(B, tb) < 2:
        tb //= 2
    # Avoid gross batch-padding waste.
    while tb > 128 and pl.cdiv(B, tb) * tb - B > tb // 2:
        tb //= 2
    return max(16, _round_up(tb, 16))


def _call_kernel(xp, pw, TB, nb, Hp, H, vmem_cap, single_buffer_weights):
    const_kwargs = {}
    if single_buffer_weights:
        # Constant index_map -> block never changes -> second pipeline buffer is pure waste.
        const_kwargs["pipeline_mode"] = pl.Buffered(1)

    x_spec = pl.BlockSpec((TB, Hp), lambda i: (i, 0))
    w_spec = pl.BlockSpec((Hp, Hp), lambda i: (0, 0), **const_kwargs)   # resident in VMEM
    v_spec = pl.BlockSpec((1, Hp), lambda i: (0, 0), **const_kwargs)
    b4_spec = pl.BlockSpec(memory_space=pltpu.MemorySpace.SMEM)
    out_spec = pl.BlockSpec((TB, _LANE), lambda i: (i, 0))

    wbuf = 1 if single_buffer_weights else 2
    need = (
        3 * Hp * Hp * 2 * wbuf        # bf16 H x H weights
        + 12 * Hp * 4 * wbuf          # LN / bias / w4 rows
        + 2 * TB * Hp * 2             # double-buffered bf16 x tiles
        + 2 * TB * _LANE * 4          # double-buffered output tiles
        + TB * Hp * 10                # live f32 y / temps + bf16 h
    )
    vmem_limit = int(min(max(int(need * 1.3), 8 << 20), int(0.87 * vmem_cap)))

    kernel = functools.partial(_discriminator_kernel, h_real=H)
    Bp = nb * TB

    return pl.pallas_call(
        kernel,
        out_shape=jax.ShapeDtypeStruct((Bp, _LANE), jnp.float32),
        grid_spec=pltpu.PrefetchScalarGridSpec(
            num_scalar_prefetch=0,
            grid=(nb,),
            in_specs=[
                x_spec,
                w_spec, v_spec, v_spec, v_spec,
                w_spec, v_spec, v_spec, v_spec,
                w_spec, v_spec, v_spec, v_spec,
                v_spec, b4_spec,
            ],
            out_specs=out_spec,
        ),
        compiler_params=pltpu.CompilerParams(
            dimension_semantics=("parallel",),
            vmem_limit_bytes=vmem_limit,
        ),
    )(
        xp,
        pw["w1"], pw["b1"], pw["g1"], pw["be1"],
        pw["w2"], pw["b2"], pw["g2"], pw["be2"],
        pw["w3"], pw["b3"], pw["g3"], pw["be3"],
        pw["w4"], pw["b4"],
    )


def discriminator_forward(x, params, *, block_b=None):
    """x: (B, H) float32.  params: raw dict from init_params OR output of prepare_params.
    Returns (B,) float32 sigmoid outputs."""
    prepared = params if "Hp" in params else prepare_params(params)
    B, H = x.shape
    assert H == prepared["H"], (H, prepared["H"])
    Hp = prepared["Hp"]

    vmem_cap = _vmem_capacity_bytes()
    if block_b is None:
        TB = _pick_block_b(B, Hp, vmem_cap)
    else:
        TB = max(16, _round_up(int(block_b), 16))   # keep (8,128)/bf16-pack rules satisfied
    nb = pl.cdiv(B, TB)
    Bp = nb * TB

    # Stream x in bf16 (matmul input dtype anyway): half the DMA bytes and x buffer VMEM.
    xp = _pad2d(x.astype(jnp.bfloat16), Bp, Hp)

    try:
        out = _call_kernel(xp, prepared, TB, nb, Hp, H, vmem_cap, single_buffer_weights=True)
    except Exception:
        # Fallback if this JAX build rejects pipeline_mode=pl.Buffered(1) on a BlockSpec.
        out = _call_kernel(xp, prepared, TB, nb, Hp, H, vmem_cap, single_buffer_weights=False)

    # Lane 0 of each row holds that sample's sigmoid output; drop the batch padding.
    return out[:B, 0]


def init_params(key, hidden_size):
    """Matches the PyTorch init: Linear weights ~ N(0, 0.02), biases 0, LN gamma=1 beta=0.
    Linear weights are stored as (in, out) so the kernel computes x @ W."""
    H = hidden_size
    k1, k2, k3, k4 = jax.random.split(key, 4)
    std = 0.02
    return {
        "w1": std * jax.random.normal(k1, (H, H), jnp.float32),
        "b1": jnp.zeros((1, H), jnp.float32),
        "g1": jnp.ones((1, H), jnp.float32),
        "be1": jnp.zeros((1, H), jnp.float32),
        "w2": std * jax.random.normal(k2, (H, H), jnp.float32),
        "b2": jnp.zeros((1, H), jnp.float32),
        "g2": jnp.ones((1, H), jnp.float32),
        "be2": jnp.zeros((1, H), jnp.float32),
        "w3": std * jax.random.normal(k3, (H, H), jnp.float32),
        "b3": jnp.zeros((1, H), jnp.float32),
        "g3": jnp.ones((1, H), jnp.float32),
        "be3": jnp.zeros((1, H), jnp.float32),
        "w4": std * jax.random.normal(k4, (H, 1), jnp.float32),
        "b4": jnp.zeros((1, 1), jnp.float32),
    }


def _reference_forward_f32(x, params):
    """Pure-f32 reference equivalent to the PyTorch module."""
    def layer(h, w, b, g, be):
        y = h @ w + b
        mu = y.mean(-1, keepdims=True)
        var = ((y - mu) ** 2).mean(-1, keepdims=True)
        yn = (y - mu) / jnp.sqrt(var + _EPS) * g + be
        return jnp.maximum(yn, 0.0)

    h = layer(x, params["w1"], params["b1"], params["g1"], params["be1"])
    h = layer(h, params["w2"], params["b2"], params["g2"], params["be2"])
    h = layer(h, params["w3"], params["b3"], params["g3"], params["be3"])
    return jax.nn.sigmoid(h @ params["w4"] + params["b4"]).reshape(-1)


def _reference_forward_matched(x, params):
    """Reference mirroring the kernel's numerics (bf16 matmul inputs & inter-layer
    activations, f32 accumulation, one-pass LN)."""
    def layer(h, w, b, g, be):
        y = jnp.dot(h.astype(jnp.bfloat16), w.astype(jnp.bfloat16),
                    preferred_element_type=jnp.float32) + b
        hdim = y.shape[-1]
        s = y.sum(-1, keepdims=True)
        s2 = (y * y).sum(-1, keepdims=True)
        mu = s / hdim
        var = jnp.maximum(s2 / hdim - mu * mu, 0.0)
        yn = (y - mu) * jax.lax.rsqrt(var + _EPS) * g + be
        return jnp.maximum(yn, 0.0).astype(jnp.bfloat16)

    h = layer(x, params["w1"], params["b1"], params["g1"], params["be1"])
    h = layer(h, params["w2"], params["b2"], params["g2"], params["be2"])
    h = layer(h, params["w3"], params["b3"], params["g3"], params["be3"])
    logit = (h * params["w4"].reshape(1, -1)).sum(-1, keepdims=True) + params["b4"]
    return jax.nn.sigmoid(logit).reshape(-1)


if __name__ == "__main__":
    hidden_size = 32
    batch = 8

    key = jax.random.PRNGKey(0)
    kx, kp = jax.random.split(key)
    x = jax.random.normal(kx, (batch, hidden_size), jnp.float32)
    params = init_params(kp, hidden_size)

    prepped = prepare_params(params)   # one-time weight pad + bf16 cast (hoisted out of forward)
    out = jax.block_until_ready(discriminator_forward(x, prepped))
    assert out.shape == (batch,)

    ref_matched = _reference_forward_matched(x, params)   # same numerics as the kernel
    ref_f32 = _reference_forward_f32(x, params)           # PyTorch-equivalent f32 math
    assert jnp.allclose(out, ref_matched, atol=5e-4, rtol=5e-4), (out, ref_matched)
    assert jnp.allclose(out, ref_f32, atol=2e-2, rtol=2e-2), (out, ref_f32)

    print("KERNEL_OK")
</pallas_src>

<mosaic_0001>
module attributes {stable_mosaic.version = 11 : i64} {
  func.func @_discriminator_kernel(%arg0: i32, %arg1: memref<16x128xbf16, #tpu.memory_space<vmem>>, %arg2: memref<128x128xbf16, #tpu.memory_space<vmem>>, %arg3: memref<1x128xf32, #tpu.memory_space<vmem>>, %arg4: memref<1x128xf32, #tpu.memory_space<vmem>>, %arg5: memref<1x128xf32, #tpu.memory_space<vmem>>, %arg6: memref<128x128xbf16, #tpu.memory_space<vmem>>, %arg7: memref<1x128xf32, #tpu.memory_space<vmem>>, %arg8: memref<1x128xf32, #tpu.memory_space<vmem>>, %arg9: memref<1x128xf32, #tpu.memory_space<vmem>>, %arg10: memref<128x128xbf16, #tpu.memory_space<vmem>>, %arg11: memref<1x128xf32, #tpu.memory_space<vmem>>, %arg12: memref<1x128xf32, #tpu.memory_space<vmem>>, %arg13: memref<1x128xf32, #tpu.memory_space<vmem>>, %arg14: memref<1x128xf32, #tpu.memory_space<vmem>>, %arg15: memref<1xf32, #tpu.memory_space<smem>>, %arg16: memref<16x128xf32, #tpu.memory_space<vmem>>) attributes {dimension_semantics = [#tpu.dimension_semantics<parallel>], iteration_bounds = array<i64: 1>, scalar_prefetch = 0 : i64, scratch_operands = 0 : i64, tpu.core_type = #tpu.core_type<tc>, window_params = [{transform_indices = @transform_0, window_bounds = array<i64: 16, 128>}, {pipeline_mode = #tpu.pipeline_mode<synchronous>, transform_indices = @transform_1, window_bounds = array<i64: 128, 128>}, {pipeline_mode = #tpu.pipeline_mode<synchronous>, transform_indices = @transform_2, window_bounds = array<i64: 1, 128>}, {pipeline_mode = #tpu.pipeline_mode<synchronous>, transform_indices = @transform_3, window_bounds = array<i64: 1, 128>}, {pipeline_mode = #tpu.pipeline_mode<synchronous>, transform_indices = @transform_4, window_bounds = array<i64: 1, 128>}, {pipeline_mode = #tpu.pipeline_mode<synchronous>, transform_indices = @transform_5, window_bounds = array<i64: 128, 128>}, {pipeline_mode = #tpu.pipeline_mode<synchronous>, transform_indices = @transform_6, window_bounds = array<i64: 1, 128>}, {pipeline_mode = #tpu.pipeline_mode<synchronous>, transform_indices = @transform_7, window_bounds = array<i64: 1, 128>}, {pipeline_mode = #tpu.pipeline_mode<synchronous>, transform_indices = @transform_8, window_bounds = array<i64: 1, 128>}, {pipeline_mode = #tpu.pipeline_mode<synchronous>, transform_indices = @transform_9, window_bounds = array<i64: 128, 128>}, {pipeline_mode = #tpu.pipeline_mode<synchronous>, transform_indices = @transform_10, window_bounds = array<i64: 1, 128>}, {pipeline_mode = #tpu.pipeline_mode<synchronous>, transform_indices = @transform_11, window_bounds = array<i64: 1, 128>}, {pipeline_mode = #tpu.pipeline_mode<synchronous>, transform_indices = @transform_12, window_bounds = array<i64: 1, 128>}, {pipeline_mode = #tpu.pipeline_mode<synchronous>, transform_indices = @transform_13, window_bounds = array<i64: 1, 128>}, {transform_indices = @transform_14, window_bounds = array<i64: 1>}, {transform_indices = @transform_15, window_bounds = array<i64: 16, 128>}]} {
    %c0 = arith.constant 0 : index
    %c0_0 = arith.constant 0 : index
    %0 = vector.load %arg1[%c0, %c0_0] : memref<16x128xbf16, #tpu.memory_space<vmem>>, vector<16x128xbf16>
    %c0_1 = arith.constant 0 : index
    %c0_2 = arith.constant 0 : index
    %1 = vector.load %arg2[%c0_1, %c0_2] : memref<128x128xbf16, #tpu.memory_space<vmem>>, vector<128x128xbf16>
    %cst = arith.constant dense<0.000000e+00> : vector<16x128xf32>
    %2 = tpu.matmul %0, %1, %cst {dimension_numbers = #tpu.dot_dimension_numbers<[1], [0], [0], [1], [0, 0, 1, 1], [], []>} : vector<16x128xbf16>, vector<128x128xbf16>, vector<16x128xf32> -> vector<16x128xf32>
    %c0_3 = arith.constant 0 : index
    %c0_4 = arith.constant 0 : index
    %3 = vector.load %arg3[%c0_3, %c0_4] : memref<1x128xf32, #tpu.memory_space<vmem>>, vector<1x128xf32>
    %4 = vector.broadcast %3 : vector<1x128xf32> to vector<16x128xf32>
    %5 = arith.addf %2, %4 : vector<16x128xf32>
    %cst_5 = arith.constant dense<0.000000e+00> : vector<16xf32>
    %6 = vector.multi_reduction <add>, %5, %cst_5 [1] : vector<16x128xf32> to vector<16xf32>
    %7 = vector.shape_cast %6 : vector<16xf32> to vector<16x1xf32>
    %8 = arith.mulf %5, %5 : vector<16x128xf32>
    %cst_6 = arith.constant dense<0.000000e+00> : vector<16xf32>
    %9 = vector.multi_reduction <add>, %8, %cst_6 [1] : vector<16x128xf32> to vector<16xf32>
    %10 = vector.shape_cast %9 : vector<16xf32> to vector<16x1xf32>
    %cst_7 = arith.constant 3.125000e-02 : f32
    %11 = vector.broadcast %cst_7 : f32 to vector<16x1xf32>
    %12 = arith.mulf %7, %11 : vector<16x1xf32>
    %cst_8 = arith.constant 3.125000e-02 : f32
    %13 = vector.broadcast %cst_8 : f32 to vector<16x1xf32>
    %14 = arith.mulf %10, %13 : vector<16x1xf32>
    %15 = arith.mulf %12, %12 : vector<16x1xf32>
    %16 = arith.subf %14, %15 : vector<16x1xf32>
    %cst_9 = arith.constant 0.000000e+00 : f32
    %17 = vector.broadcast %cst_9 : f32 to vector<16x1xf32>
    %18 = arith.maximumf %16, %17 : vector<16x1xf32>
    %19 = vector.broadcast %12 : vector<16x1xf32> to vector<16x128xf32>
    %20 = arith.subf %5, %19 : vector<16x128xf32>
    %cst_10 = arith.constant 9.99999974E-6 : f32
    %21 = vector.broadcast %cst_10 : f32 to vector<16x1xf32>
    %22 = arith.addf %18, %21 : vector<16x1xf32>
    %23 = math.rsqrt %22 : vector<16x1xf32>
    %24 = vector.broadcast %23 : vector<16x1xf32> to vector<16x128xf32>
    %25 = arith.mulf %20, %24 : vector<16x128xf32>
    %c0_11 = arith.constant 0 : index
    %c0_12 = arith.constant 0 : index
    %26 = vector.load %arg4[%c0_11, %c0_12] : memref<1x128xf32, #tpu.memory_space<vmem>>, vector<1x128xf32>
    %27 = vector.broadcast %26 : vector<1x128xf32> to vector<16x128xf32>
    %28 = arith.mulf %25, %27 : vector<16x128xf32>
    %c0_13 = arith.constant 0 : index
    %c0_14 = arith.constant 0 : index
    %29 = vector.load %arg5[%c0_13, %c0_14] : memref<1x128xf32, #tpu.memory_space<vmem>>, vector<1x128xf32>
    %30 = vector.broadcast %29 : vector<1x128xf32> to vector<16x128xf32>
    %31 = arith.addf %28, %30 : vector<16x128xf32>
    %cst_15 = arith.constant 0.000000e+00 : f32
    %32 = vector.broadcast %cst_15 : f32 to vector<16x128xf32>
    %33 = arith.maximumf %31, %32 : vector<16x128xf32>
    %34 = arith.truncf %33 : vector<16x128xf32> to vector<16x128xbf16>
    %c0_16 = arith.constant 0 : index
    %c0_17 = arith.constant 0 : index
    %35 = vector.load %arg6[%c0_16, %c0_17] : memref<128x128xbf16, #tpu.memory_space<vmem>>, vector<128x128xbf16>
    %cst_18 = arith.constant dense<0.000000e+00> : vector<16x128xf32>
    %36 = tpu.matmul %34, %35, %cst_18 {dimension_numbers = #tpu.dot_dimension_numbers<[1], [0], [0], [1], [0, 0, 1, 1], [], []>} : vector<16x128xbf16>, vector<128x128xbf16>, vector<16x128xf32> -> vector<16x128xf32>
    %c0_19 = arith.constant 0 : index
    %c0_20 = arith.constant 0 : index
    %37 = vector.load %arg7[%c0_19, %c0_20] : memref<1x128xf32, #tpu.memory_space<vmem>>, vector<1x128xf32>
    %38 = vector.broadcast %37 : vector<1x128xf32> to vector<16x128xf32>
    %39 = arith.addf %36, %38 : vector<16x128xf32>
    %cst_21 = arith.constant dense<0.000000e+00> : vector<16xf32>
    %40 = vector.multi_reduction <add>, %39, %cst_21 [1] : vector<16x128xf32> to vector<16xf32>
    %41 = vector.shape_cast %40 : vector<16xf32> to vector<16x1xf32>
    %42 = arith.mulf %39, %39 : vector<16x128xf32>
    %cst_22 = arith.constant dense<0.000000e+00> : vector<16xf32>
    %43 = vector.multi_reduction <add>, %42, %cst_22 [1] : vector<16x128xf32> to vector<16xf32>
    %44 = vector.shape_cast %43 : vector<16xf32> to vector<16x1xf32>
    %cst_23 = arith.constant 3.125000e-02 : f32
    %45 = vector.broadcast %cst_23 : f32 to vector<16x1xf32>
    %46 = arith.mulf %41, %45 : vector<16x1xf32>
    %cst_24 = arith.constant 3.125000e-02 : f32
    %47 = vector.broadcast %cst_24 : f32 to vector<16x1xf32>
    %48 = arith.mulf %44, %47 : vector<16x1xf32>
    %49 = arith.mulf %46, %46 : vector<16x1xf32>
    %50 = arith.subf %48, %49 : vector<16x1xf32>
    %cst_25 = arith.constant 0.000000e+00 : f32
    %51 = vector.broadcast %cst_25 : f32 to vector<16x1xf32>
    %52 = arith.maximumf %50, %51 : vector<16x1xf32>
    %53 = vector.broadcast %46 : vector<16x1xf32> to vector<16x128xf32>
    %54 = arith.subf %39, %53 : vector<16x128xf32>
    %cst_26 = arith.constant 9.99999974E-6 : f32
    %55 = vector.broadcast %cst_26 : f32 to vector<16x1xf32>
    %56 = arith.addf %52, %55 : vector<16x1xf32>
    %57 = math.rsqrt %56 : vector<16x1xf32>
    %58 = vector.broadcast %57 : vector<16x1xf32> to vector<16x128xf32>
    %59 = arith.mulf %54, %58 : vector<16x128xf32>
    %c0_27 = arith.constant 0 : index
    %c0_28 = arith.constant 0 : index
    %60 = vector.load %arg8[%c0_27, %c0_28] : memref<1x128xf32, #tpu.memory_space<vmem>>, vector<1x128xf32>
    %61 = vector.broadcast %60 : vector<1x128xf32> to vector<16x128xf32>
    %62 = arith.mulf %59, %61 : vector<16x128xf32>
    %c0_29 = arith.constant 0 : index
    %c0_30 = arith.constant 0 : index
    %63 = vector.load %arg9[%c0_29, %c0_30] : memref<1x128xf32, #tpu.memory_space<vmem>>, vector<1x128xf32>
    %64 = vector.broadcast %63 : vector<1x128xf32> to vector<16x128xf32>
    %65 = arith.addf %62, %64 : vector<16x128xf32>
    %cst_31 = arith.constant 0.000000e+00 : f32
    %66 = vector.broadcast %cst_31 : f32 to vector<16x128xf32>
    %67 = arith.maximumf %65, %66 : vector<16x128xf32>
    %68 = arith.truncf %67 : vector<16x128xf32> to vector<16x128xbf16>
    %c0_32 = arith.constant 0 : index
    %c0_33 = arith.constant 0 : index
    %69 = vector.load %arg10[%c0_32, %c0_33] : memref<128x128xbf16, #tpu.memory_space<vmem>>, vector<128x128xbf16>
    %cst_34 = arith.constant dense<0.000000e+00> : vector<16x128xf32>
    %70 = tpu.matmul %68, %69, %cst_34 {dimension_numbers = #tpu.dot_dimension_numbers<[1], [0], [0], [1], [0, 0, 1, 1], [], []>} : vector<16x128xbf16>, vector<128x128xbf16>, vector<16x128xf32> -> vector<16x128xf32>
    %c0_35 = arith.constant 0 : index
    %c0_36 = arith.constant 0 : index
    %71 = vector.load %arg11[%c0_35, %c0_36] : memref<1x128xf32, #tpu.memory_space<vmem>>, vector<1x128xf32>
    %72 = vector.broadcast %71 : vector<1x128xf32> to vector<16x128xf32>
    %73 = arith.addf %70, %72 : vector<16x128xf32>
    %cst_37 = arith.constant dense<0.000000e+00> : vector<16xf32>
    %74 = vector.multi_reduction <add>, %73, %cst_37 [1] : vector<16x128xf32> to vector<16xf32>
    %75 = vector.shape_cast %74 : vector<16xf32> to vector<16x1xf32>
    %76 = arith.mulf %73, %73 : vector<16x128xf32>
    %cst_38 = arith.constant dense<0.000000e+00> : vector<16xf32>
    %77 = vector.multi_reduction <add>, %76, %cst_38 [1] : vector<16x128xf32> to vector<16xf32>
    %78 = vector.shape_cast %77 : vector<16xf32> to vector<16x1xf32>
    %cst_39 = arith.constant 3.125000e-02 : f32
    %79 = vector.broadcast %cst_39 : f32 to vector<16x1xf32>
    %80 = arith.mulf %75, %79 : vector<16x1xf32>
    %cst_40 = arith.constant 3.125000e-02 : f32
    %81 = vector.broadcast %cst_40 : f32 to vector<16x1xf32>
    %82 = arith.mulf %78, %81 : vector<16x1xf32>
    %83 = arith.mulf %80, %80 : vector<16x1xf32>
    %84 = arith.subf %82, %83 : vector<16x1xf32>
    %cst_41 = arith.constant 0.000000e+00 : f32
    %85 = vector.broadcast %cst_41 : f32 to vector<16x1xf32>
    %86 = arith.maximumf %84, %85 : vector<16x1xf32>
    %87 = vector.broadcast %80 : vector<16x1xf32> to vector<16x128xf32>
    %88 = arith.subf %73, %87 : vector<16x128xf32>
    %cst_42 = arith.constant 9.99999974E-6 : f32
    %89 = vector.broadcast %cst_42 : f32 to vector<16x1xf32>
    %90 = arith.addf %86, %89 : vector<16x1xf32>
    %91 = math.rsqrt %90 : vector<16x1xf32>
    %92 = vector.broadcast %91 : vector<16x1xf32> to vector<16x128xf32>
    %93 = arith.mulf %88, %92 : vector<16x128xf32>
    %c0_43 = arith.constant 0 : index
    %c0_44 = arith.constant 0 : index
    %94 = vector.load %arg12[%c0_43, %c0_44] : memref<1x128xf32, #tpu.memory_space<vmem>>, vector<1x128xf32>
    %95 = vector.broadcast %94 : vector<1x128xf32> to vector<16x128xf32>
    %96 = arith.mulf %93, %95 : vector<16x128xf32>
    %c0_45 = arith.constant 0 : index
    %c0_46 = arith.constant 0 : index
    %97 = vector.load %arg13[%c0_45, %c0_46] : memref<1x128xf32, #tpu.memory_space<vmem>>, vector<1x128xf32>
    %98 = vector.broadcast %97 : vector<1x128xf32> to vector<16x128xf32>
    %99 = arith.addf %96, %98 : vector<16x128xf32>
    %cst_47 = arith.constant 0.000000e+00 : f32
    %100 = vector.broadcast %cst_47 : f32 to vector<16x128xf32>
    %101 = arith.maximumf %99, %100 : vector<16x128xf32>
    %102 = arith.truncf %101 : vector<16x128xf32> to vector<16x128xbf16>
    %c0_48 = arith.constant 0 : index
    %c0_49 = arith.constant 0 : index
    %103 = vector.load %arg14[%c0_48, %c0_49] : memref<1x128xf32, #tpu.memory_space<vmem>>, vector<1x128xf32>
    %104 = arith.extf %102 : vector<16x128xbf16> to vector<16x128xf32>
    %105 = vector.broadcast %103 : vector<1x128xf32> to vector<16x128xf32>
    %106 = arith.mulf %104, %105 : vector<16x128xf32>
    %cst_50 = arith.constant dense<0.000000e+00> : vector<16xf32>
    %107 = vector.multi_reduction <add>, %106, %cst_50 [1] : vector<16x128xf32> to vector<16xf32>
    %108 = vector.shape_cast %107 : vector<16xf32> to vector<16x1xf32>
    %c0_51 = arith.constant 0 : index
    %109 = memref.load %arg15[%c0_51] : memref<1xf32, #tpu.memory_space<smem>>
    %110 = vector.broadcast %109 : f32 to vector<16x1xf32>
    %111 = arith.addf %108, %110 : vector<16x1xf32>
    %112 = arith.negf %111 : vector<16x1xf32>
    %113 = math.exp %112 : vector<16x1xf32>
    %cst_52 = arith.constant 1.000000e+00 : f32
    %114 = vector.broadcast %cst_52 : f32 to vector<16x1xf32>
    %115 = arith.addf %114, %113 : vector<16x1xf32>
    %116 = arith.divf %114, %115 : vector<16x1xf32>
    %117 = vector.shape_cast %116 : vector<16x1xf32> to vector<16x1xf32>
    %118 = vector.broadcast %117 : vector<16x1xf32> to vector<16x128xf32>
    %c0_53 = arith.constant 0 : index
    %c0_54 = arith.constant 0 : index
    %119 = vector.load %arg16[%c0_53, %c0_54] : memref<16x128xf32, #tpu.memory_space<vmem>>, vector<16x128xf32>
    tpu.vector_store %arg16[%c0_53, %c0_54], %118 {strides = array<i32>} : memref<16x128xf32, #tpu.memory_space<vmem>>, vector<16x128xf32>,
    return
  }
  func.func @transform_0(%arg0: i32) -> (i32, i32) {
    %c0_i32 = arith.constant 0 : i32
    %c0_i32_0 = arith.constant 0 : i32
    return %arg0, %c0_i32 : i32, i32
  }
  func.func @transform_1(%arg0: i32) -> (i32, i32) {
    %c0_i32 = arith.constant 0 : i32
    %c0_i32_0 = arith.constant 0 : i32
    %c0_i32_1 = arith.constant 0 : i32
    return %c0_i32, %c0_i32_0 : i32, i32
  }
  func.func @transform_2(%arg0: i32) -> (i32, i32) {
    %c0_i32 = arith.constant 0 : i32
    %c0_i32_0 = arith.constant 0 : i32
    %c0_i32_1 = arith.constant 0 : i32
    return %c0_i32, %c0_i32_0 : i32, i32
  }
  func.func @transform_3(%arg0: i32) -> (i32, i32) {
    %c0_i32 = arith.constant 0 : i32
    %c0_i32_0 = arith.constant 0 : i32
    %c0_i32_1 = arith.constant 0 : i32
    return %c0_i32, %c0_i32_0 : i32, i32
  }
  func.func @transform_4(%arg0: i32) -> (i32, i32) {
    %c0_i32 = arith.constant 0 : i32
    %c0_i32_0 = arith.constant 0 : i32
    %c0_i32_1 = arith.constant 0 : i32
    return %c0_i32, %c0_i32_0 : i32, i32
  }
  func.func @transform_5(%arg0: i32) -> (i32, i32) {
    %c0_i32 = arith.constant 0 : i32
    %c0_i32_0 = arith.constant 0 : i32
    %c0_i32_1 = arith.constant 0 : i32
    return %c0_i32, %c0_i32_0 : i32, i32
  }
  func.func @transform_6(%arg0: i32) -> (i32, i32) {
    %c0_i32 = arith.constant 0 : i32
    %c0_i32_0 = arith.constant 0 : i32
    %c0_i32_1 = arith.constant 0 : i32
    return %c0_i32, %c0_i32_0 : i32, i32
  }
  func.func @transform_7(%arg0: i32) -> (i32, i32) {
    %c0_i32 = arith.constant 0 : i32
    %c0_i32_0 = arith.constant 0 : i32
    %c0_i32_1 = arith.constant 0 : i32
    return %c0_i32, %c0_i32_0 : i32, i32
  }
  func.func @transform_8(%arg0: i32) -> (i32, i32) {
    %c0_i32 = arith.constant 0 : i32
    %c0_i32_0 = arith.constant 0 : i32
    %c0_i32_1 = arith.constant 0 : i32
    return %c0_i32, %c0_i32_0 : i32, i32
  }
  func.func @transform_9(%arg0: i32) -> (i32, i32) {
    %c0_i32 = arith.constant 0 : i32
    %c0_i32_0 = arith.constant 0 : i32
    %c0_i32_1 = arith.constant 0 : i32
    return %c0_i32, %c0_i32_0 : i32, i32
  }
  func.func @transform_10(%arg0: i32) -> (i32, i32) {
    %c0_i32 = arith.constant 0 : i32
    %c0_i32_0 = arith.constant 0 : i32
    %c0_i32_1 = arith.constant 0 : i32
    return %c0_i32, %c0_i32_0 : i32, i32
  }
  func.func @transform_11(%arg0: i32) -> (i32, i32) {
    %c0_i32 = arith.constant 0 : i32
    %c0_i32_0 = arith.constant 0 : i32
    %c0_i32_1 = arith.constant 0 : i32
    return %c0_i32, %c0_i32_0 : i32, i32
  }
  func.func @transform_12(%arg0: i32) -> (i32, i32) {
    %c0_i32 = arith.constant 0 : i32
    %c0_i32_0 = arith.constant 0 : i32
    %c0_i32_1 = arith.constant 0 : i32
    return %c0_i32, %c0_i32_0 : i32, i32
  }
  func.func @transform_13(%arg0: i32) -> (i32, i32) {
    %c0_i32 = arith.constant 0 : i32
    %c0_i32_0 = arith.constant 0 : i32
    %c0_i32_1 = arith.constant 0 : i32
    return %c0_i32, %c0_i32_0 : i32, i32
  }
  func.func @transform_14(%arg0: i32) -> i32 {
    %c0_i32 = arith.constant 0 : i32
    %c0_i32_0 = arith.constant 0 : i32
    return %c0_i32 : i32
  }
  func.func @transform_15(%arg0: i32) -> (i32, i32) {
    %c0_i32 = arith.constant 0 : i32
    %c0_i32_0 = arith.constant 0 : i32
    return %arg0, %c0_i32 : i32, i32
  }
}

module attributes {stable_mosaic.version = 11 : i64} {
  func.func @_discriminator_kernel(%arg0: i32, %arg1: memref<16x128xbf16, #tpu.memory_space<vmem>>, %arg2: memref<128x128xbf16, #tpu.memory_space<vmem>>, %arg3: memref<1x128xf32, #tpu.memory_space<vmem>>, %arg4: memref<1x128xf32, #tpu.memory_space<vmem>>, %arg5: memref<1x128xf32, #tpu.memory_space<vmem>>, %arg6: memref<128x128xbf16, #tpu.memory_space<vmem>>, %arg7: memref<1x128xf32, #tpu.memory_space<vmem>>, %arg8: memref<1x128xf32, #tpu.memory_space<vmem>>, %arg9: memref<1x128xf32, #tpu.memory_space<vmem>>, %arg10: memref<128x128xbf16, #tpu.memory_space<vmem>>, %arg11: memref<1x128xf32, #tpu.memory_space<vmem>>, %arg12: memref<1x128xf32, #tpu.memory_space<vmem>>, %arg13: memref<1x128xf32, #tpu.memory_space<vmem>>, %arg14: memref<1x128xf32, #tpu.memory_space<vmem>>, %arg15: memref<1xf32, #tpu.memory_space<smem>>, %arg16: memref<16x128xf32, #tpu.memory_space<vmem>>) attributes {dimension_semantics = [#tpu.dimension_semantics<parallel>], iteration_bounds = array<i64: 1>, scalar_prefetch = 0 : i64, scratch_operands = 0 : i64, tpu.core_type = #tpu.core_type<tc>, window_params = [{transform_indices = @transform_0, window_bounds = array<i64: 16, 128>}, {pipeline_mode = #tpu.pipeline_mode<synchronous>, transform_indices = @transform_1, window_bounds = array<i64: 128, 128>}, {pipeline_mode = #tpu.pipeline_mode<synchronous>, transform_indices = @transform_2, window_bounds = array<i64: 1, 128>}, {pipeline_mode = #tpu.pipeline_mode<synchronous>, transform_indices = @transform_3, window_bounds = array<i64: 1, 128>}, {pipeline_mode = #tpu.pipeline_mode<synchronous>, transform_indices = @transform_4, window_bounds = array<i64: 1, 128>}, {pipeline_mode = #tpu.pipeline_mode<synchronous>, transform_indices = @transform_5, window_bounds = array<i64: 128, 128>}, {pipeline_mode = #tpu.pipeline_mode<synchronous>, transform_indices = @transform_6, window_bounds = array<i64: 1, 128>}, {pipeline_mode = #tpu.pipeline_mode<synchronous>, transform_indices = @transform_7, window_bounds = array<i64: 1, 128>}, {pipeline_mode = #tpu.pipeline_mode<synchronous>, transform_indices = @transform_8, window_bounds = array<i64: 1, 128>}, {pipeline_mode = #tpu.pipeline_mode<synchronous>, transform_indices = @transform_9, window_bounds = array<i64: 128, 128>}, {pipeline_mode = #tpu.pipeline_mode<synchronous>, transform_indices = @transform_10, window_bounds = array<i64: 1, 128>}, {pipeline_mode = #tpu.pipeline_mode<synchronous>, transform_indices = @transform_11, window_bounds = array<i64: 1, 128>}, {pipeline_mode = #tpu.pipeline_mode<synchronous>, transform_indices = @transform_12, window_bounds = array<i64: 1, 128>}, {pipeline_mode = #tpu.pipeline_mode<synchronous>, transform_indices = @transform_13, window_bounds = array<i64: 1, 128>}, {transform_indices = @transform_14, window_bounds = array<i64: 1>}, {transform_indices = @transform_15, window_bounds = array<i64: 16, 128>}]} {
    %c0 = arith.constant 0 : index
    %c0_0 = arith.constant 0 : index
    %0 = vector.load %arg1[%c0, %c0_0] : memref<16x128xbf16, #tpu.memory_space<vmem>>, vector<16x128xbf16>
    %c0_1 = arith.constant 0 : index
    %c0_2 = arith.constant 0 : index
    %1 = vector.load %arg2[%c0_1, %c0_2] : memref<128x128xbf16, #tpu.memory_space<vmem>>, vector<128x128xbf16>
    %cst = arith.constant dense<0.000000e+00> : vector<16x128xf32>
    %2 = tpu.matmul %0, %1, %cst {dimension_numbers = #tpu.dot_dimension_numbers<[1], [0], [0], [1], [0, 0, 1, 1], [], []>} : vector<16x128xbf16>, vector<128x128xbf16>, vector<16x128xf32> -> vector<16x128xf32>
    %c0_3 = arith.constant 0 : index
    %c0_4 = arith.constant 0 : index
    %3 = vector.load %arg3[%c0_3, %c0_4] : memref<1x128xf32, #tpu.memory_space<vmem>>, vector<1x128xf32>
    %4 = vector.broadcast %3 : vector<1x128xf32> to vector<16x128xf32>
    %5 = arith.addf %2, %4 : vector<16x128xf32>
    %cst_5 = arith.constant dense<0.000000e+00> : vector<16xf32>
    %6 = vector.multi_reduction <add>, %5, %cst_5 [1] : vector<16x128xf32> to vector<16xf32>
    %7 = vector.shape_cast %6 : vector<16xf32> to vector<16x1xf32>
    %8 = arith.mulf %5, %5 : vector<16x128xf32>
    %cst_6 = arith.constant dense<0.000000e+00> : vector<16xf32>
    %9 = vector.multi_reduction <add>, %8, %cst_6 [1] : vector<16x128xf32> to vector<16xf32>
    %10 = vector.shape_cast %9 : vector<16xf32> to vector<16x1xf32>
    %cst_7 = arith.constant 3.125000e-02 : f32
    %11 = vector.broadcast %cst_7 : f32 to vector<16x1xf32>
    %12 = arith.mulf %7, %11 : vector<16x1xf32>
    %cst_8 = arith.constant 3.125000e-02 : f32
    %13 = vector.broadcast %cst_8 : f32 to vector<16x1xf32>
    %14 = arith.mulf %10, %13 : vector<16x1xf32>
    %15 = arith.mulf %12, %12 : vector<16x1xf32>
    %16 = arith.subf %14, %15 : vector<16x1xf32>
    %cst_9 = arith.constant 0.000000e+00 : f32
    %17 = vector.broadcast %cst_9 : f32 to vector<16x1xf32>
    %18 = arith.maximumf %16, %17 : vector<16x1xf32>
    %19 = vector.broadcast %12 : vector<16x1xf32> to vector<16x128xf32>
    %20 = arith.subf %5, %19 : vector<16x128xf32>
    %cst_10 = arith.constant 9.99999974E-6 : f32
    %21 = vector.broadcast %cst_10 : f32 to vector<16x1xf32>
    %22 = arith.addf %18, %21 : vector<16x1xf32>
    %23 = math.rsqrt %22 : vector<16x1xf32>
    %24 = vector.broadcast %23 : vector<16x1xf32> to vector<16x128xf32>
    %25 = arith.mulf %20, %24 : vector<16x128xf32>
    %c0_11 = arith.constant 0 : index
    %c0_12 = arith.constant 0 : index
    %26 = vector.load %arg4[%c0_11, %c0_12] : memref<1x128xf32, #tpu.memory_space<vmem>>, vector<1x128xf32>
    %27 = vector.broadcast %26 : vector<1x128xf32> to vector<16x128xf32>
    %28 = arith.mulf %25, %27 : vector<16x128xf32>
    %c0_13 = arith.constant 0 : index
    %c0_14 = arith.constant 0 : index
    %29 = vector.load %arg5[%c0_13, %c0_14] : memref<1x128xf32, #tpu.memory_space<vmem>>, vector<1x128xf32>
    %30 = vector.broadcast %29 : vector<1x128xf32> to vector<16x128xf32>
    %31 = arith.addf %28, %30 : vector<16x128xf32>
    %cst_15 = arith.constant 0.000000e+00 : f32
    %32 = vector.broadcast %cst_15 : f32 to vector<16x128xf32>
    %33 = arith.maximumf %31, %32 : vector<16x128xf32>
    %34 = arith.truncf %33 : vector<16x128xf32> to vector<16x128xbf16>
    %c0_16 = arith.constant 0 : index
    %c0_17 = arith.constant 0 : index
    %35 = vector.load %arg6[%c0_16, %c0_17] : memref<128x128xbf16, #tpu.memory_space<vmem>>, vector<128x128xbf16>
    %cst_18 = arith.constant dense<0.000000e+00> : vector<16x128xf32>
    %36 = tpu.matmul %34, %35, %cst_18 {dimension_numbers = #tpu.dot_dimension_numbers<[1], [0], [0], [1], [0, 0, 1, 1], [], []>} : vector<16x128xbf16>, vector<128x128xbf16>, vector<16x128xf32> -> vector<16x128xf32>
    %c0_19 = arith.constant 0 : index
    %c0_20 = arith.constant 0 : index
    %37 = vector.load %arg7[%c0_19, %c0_20] : memref<1x128xf32, #tpu.memory_space<vmem>>, vector<1x128xf32>
    %38 = vector.broadcast %37 : vector<1x128xf32> to vector<16x128xf32>
    %39 = arith.addf %36, %38 : vector<16x128xf32>
    %cst_21 = arith.constant dense<0.000000e+00> : vector<16xf32>
    %40 = vector.multi_reduction <add>, %39, %cst_21 [1] : vector<16x128xf32> to vector<16xf32>
    %41 = vector.shape_cast %40 : vector<16xf32> to vector<16x1xf32>
    %42 = arith.mulf %39, %39 : vector<16x128xf32>
    %cst_22 = arith.constant dense<0.000000e+00> : vector<16xf32>
    %43 = vector.multi_reduction <add>, %42, %cst_22 [1] : vector<16x128xf32> to vector<16xf32>
    %44 = vector.shape_cast %43 : vector<16xf32> to vector<16x1xf32>
    %cst_23 = arith.constant 3.125000e-02 : f32
    %45 = vector.broadcast %cst_23 : f32 to vector<16x1xf32>
    %46 = arith.mulf %41, %45 : vector<16x1xf32>
    %cst_24 = arith.constant 3.125000e-02 : f32
    %47 = vector.broadcast %cst_24 : f32 to vector<16x1xf32>
    %48 = arith.mulf %44, %47 : vector<16x1xf32>
    %49 = arith.mulf %46, %46 : vector<16x1xf32>
    %50 = arith.subf %48, %49 : vector<16x1xf32>
    %cst_25 = arith.constant 0.000000e+00 : f32
    %51 = vector.broadcast %cst_25 : f32 to vector<16x1xf32>
    %52 = arith.maximumf %50, %51 : vector<16x1xf32>
    %53 = vector.broadcast %46 : vector<16x1xf32> to vector<16x128xf32>
    %54 = arith.subf %39, %53 : vector<16x128xf32>
    %cst_26 = arith.constant 9.99999974E-6 : f32
    %55 = vector.broadcast %cst_26 : f32 to vector<16x1xf32>
    %56 = arith.addf %52, %55 : vector<16x1xf32>
    %57 = math.rsqrt %56 : vector<16x1xf32>
    %58 = vector.broadcast %57 : vector<16x1xf32> to vector<16x128xf32>
    %59 = arith.mulf %54, %58 : vector<16x128xf32>
    %c0_27 = arith.constant 0 : index
    %c0_28 = arith.constant 0 : index
    %60 = vector.load %arg8[%c0_27, %c0_28] : memref<1x128xf32, #tpu.memory_space<vmem>>, vector<1x128xf32>
    %61 = vector.broadcast %60 : vector<1x128xf32> to vector<16x128xf32>
    %62 = arith.mulf %59, %61 : vector<16x128xf32>
    %c0_29 = arith.constant 0 : index
    %c0_30 = arith.constant 0 : index
    %63 = vector.load %arg9[%c0_29, %c0_30] : memref<1x128xf32, #tpu.memory_space<vmem>>, vector<1x128xf32>
    %64 = vector.broadcast %63 : vector<1x128xf32> to vector<16x128xf32>
    %65 = arith.addf %62, %64 : vector<16x128xf32>
    %cst_31 = arith.constant 0.000000e+00 : f32
    %66 = vector.broadcast %cst_31 : f32 to vector<16x128xf32>
    %67 = arith.maximumf %65, %66 : vector<16x128xf32>
    %68 = arith.truncf %67 : vector<16x128xf32> to vector<16x128xbf16>
    %c0_32 = arith.constant 0 : index
    %c0_33 = arith.constant 0 : index
    %69 = vector.load %arg10[%c0_32, %c0_33] : memref<128x128xbf16, #tpu.memory_space<vmem>>, vector<128x128xbf16>
    %cst_34 = arith.constant dense<0.000000e+00> : vector<16x128xf32>
    %70 = tpu.matmul %68, %69, %cst_34 {dimension_numbers = #tpu.dot_dimension_numbers<[1], [0], [0], [1], [0, 0, 1, 1], [], []>} : vector<16x128xbf16>, vector<128x128xbf16>, vector<16x128xf32> -> vector<16x128xf32>
    %c0_35 = arith.constant 0 : index
    %c0_36 = arith.constant 0 : index
    %71 = vector.load %arg11[%c0_35, %c0_36] : memref<1x128xf32, #tpu.memory_space<vmem>>, vector<1x128xf32>
    %72 = vector.broadcast %71 : vector<1x128xf32> to vector<16x128xf32>
    %73 = arith.addf %70, %72 : vector<16x128xf32>
    %cst_37 = arith.constant dense<0.000000e+00> : vector<16xf32>
    %74 = vector.multi_reduction <add>, %73, %cst_37 [1] : vector<16x128xf32> to vector<16xf32>
    %75 = vector.shape_cast %74 : vector<16xf32> to vector<16x1xf32>
    %76 = arith.mulf %73, %73 : vector<16x128xf32>
    %cst_38 = arith.constant dense<0.000000e+00> : vector<16xf32>
    %77 = vector.multi_reduction <add>, %76, %cst_38 [1] : vector<16x128xf32> to vector<16xf32>
    %78 = vector.shape_cast %77 : vector<16xf32> to vector<16x1xf32>
    %cst_39 = arith.constant 3.125000e-02 : f32
    %79 = vector.broadcast %cst_39 : f32 to vector<16x1xf32>
    %80 = arith.mulf %75, %79 : vector<16x1xf32>
    %cst_40 = arith.constant 3.125000e-02 : f32
    %81 = vector.broadcast %cst_40 : f32 to vector<16x1xf32>
    %82 = arith.mulf %78, %81 : vector<16x1xf32>
    %83 = arith.mulf %80, %80 : vector<16x1xf32>
    %84 = arith.subf %82, %83 : vector<16x1xf32>
    %cst_41 = arith.constant 0.000000e+00 : f32
    %85 = vector.broadcast %cst_41 : f32 to vector<16x1xf32>
    %86 = arith.maximumf %84, %85 : vector<16x1xf32>
    %87 = vector.broadcast %80 : vector<16x1xf32> to vector<16x128xf32>
    %88 = arith.subf %73, %87 : vector<16x128xf32>
    %cst_42 = arith.constant 9.99999974E-6 : f32
    %89 = vector.broadcast %cst_42 : f32 to vector<16x1xf32>
    %90 = arith.addf %86, %89 : vector<16x1xf32>
    %91 = math.rsqrt %90 : vector<16x1xf32>
    %92 = vector.broadcast %91 : vector<16x1xf32> to vector<16x128xf32>
    %93 = arith.mulf %88, %92 : vector<16x128xf32>
    %c0_43 = arith.constant 0 : index
    %c0_44 = arith.constant 0 : index
    %94 = vector.load %arg12[%c0_43, %c0_44] : memref<1x128xf32, #tpu.memory_space<vmem>>, vector<1x128xf32>
    %95 = vector.broadcast %94 : vector<1x128xf32> to vector<16x128xf32>
    %96 = arith.mulf %93, %95 : vector<16x128xf32>
    %c0_45 = arith.constant 0 : index
    %c0_46 = arith.constant 0 : index
    %97 = vector.load %arg13[%c0_45, %c0_46] : memref<1x128xf32, #tpu.memory_space<vmem>>, vector<1x128xf32>
    %98 = vector.broadcast %97 : vector<1x128xf32> to vector<16x128xf32>
    %99 = arith.addf %96, %98 : vector<16x128xf32>
    %cst_47 = arith.constant 0.000000e+00 : f32
    %100 = vector.broadcast %cst_47 : f32 to vector<16x128xf32>
    %101 = arith.maximumf %99, %100 : vector<16x128xf32>
    %102 = arith.truncf %101 : vector<16x128xf32> to vector<16x128xbf16>
    %c0_48 = arith.constant 0 : index
    %c0_49 = arith.constant 0 : index
    %103 = vector.load %arg14[%c0_48, %c0_49] : memref<1x128xf32, #tpu.memory_space<vmem>>, vector<1x128xf32>
    %104 = arith.extf %102 : vector<16x128xbf16> to vector<16x128xf32>
    %105 = vector.broadcast %103 : vector<1x128xf32> to vector<16x128xf32>
    %106 = arith.mulf %104, %105 : vector<16x128xf32>
    %cst_50 = arith.constant dense<0.000000e+00> : vector<16xf32>
    %107 = vector.multi_reduction <add>, %106, %cst_50 [1] : vector<16x128xf32> to vector<16xf32>
    %108 = vector.shape_cast %107 : vector<16xf32> to vector<16x1xf32>
    %c0_51 = arith.constant 0 : index
    %109 = memref.load %arg15[%c0_51] : memref<1xf32, #tpu.memory_space<smem>>
    %110 = vector.broadcast %109 : f32 to vector<16x1xf32>
    %111 = arith.addf %108, %110 : vector<16x1xf32>
    %112 = arith.negf %111 : vector<16x1xf32>
    %113 = math.exp %112 : vector<16x1xf32>
    %cst_52 = arith.constant 1.000000e+00 : f32
    %114 = vector.broadcast %cst_52 : f32 to vector<16x1xf32>
    %115 = arith.addf %114, %113 : vector<16x1xf32>
    %116 = arith.divf %114, %115 : vector<16x1xf32>
    %117 = vector.shape_cast %116 : vector<16x1xf32> to vector<16x1xf32>
    %118 = vector.broadcast %117 : vector<16x1xf32> to vector<16x128xf32>
    %c0_53 = arith.constant 0 : index
    %c0_54 = arith.constant 0 : index
    %119 = vector.load %arg16[%c0_53, %c0_54] : memref<16x128xf32, #tpu.memory_space<vmem>>, vector<16x128xf32>
    tpu.vector_store %arg16[%c0_53, %c0_54], %118 {strides = array<i32>} : memref<16x128xf32, #tpu.memory_space<vmem>>, vector<16x128xf32>,
    return
  }
  func.func @transform_0(%arg0: i32) -> (i32, i32) {
    %c0_i32 = arith.constant 0 : i32
    %c0_i32_0 = arith.constant 0 : i32
    return %arg0, %c0_i32 : i32, i32
  }
  func.func @transform_1(%arg0: i32) -> (i32, i32) {
    %c0_i32 = arith.constant 0 : i32
    %c0_i32_0 = arith.constant 0 : i32
    %c0_i32_1 = arith.constant 0 : i32
    return %c0_i32, %c0_i32_0 : i32, i32
  }
  func.func @transform_2(%arg0: i32) -> (i32, i32) {
    %c0_i32 = arith.constant 0 : i32
    %c0_i32_0 = arith.constant 0 : i32
    %c0_i32_1 = arith.constant 0 : i32
    return %c0_i32, %c0_i32_0 : i32, i32
  }
  func.func @transform_3(%arg0: i32) -> (i32, i32) {
    %c0_i32 = arith.constant 0 : i32
    %c0_i32_0 = arith.constant 0 : i32
    %c0_i32_1 = arith.constant 0 : i32
    return %c0_i32, %c0_i32_0 : i32, i32
  }
  func.func @transform_4(%arg0: i32) -> (i32, i32) {
    %c0_i32 = arith.constant 0 : i32
    %c0_i32_0 = arith.constant 0 : i32
    %c0_i32_1 = arith.constant 0 : i32
    return %c0_i32, %c0_i32_0 : i32, i32
  }
  func.func @transform_5(%arg0: i32) -> (i32, i32) {
    %c0_i32 = arith.constant 0 : i32
    %c0_i32_0 = arith.constant 0 : i32
    %c0_i32_1 = arith.constant 0 : i32
    return %c0_i32, %c0_i32_0 : i32, i32
  }
  func.func @transform_6(%arg0: i32) -> (i32, i32) {
    %c0_i32 = arith.constant 0 : i32
    %c0_i32_0 = arith.constant 0 : i32
    %c0_i32_1 = arith.constant 0 : i32
    return %c0_i32, %c0_i32_0 : i32, i32
  }
  func.func @transform_7(%arg0: i32) -> (i32, i32) {
    %c0_i32 = arith.constant 0 : i32
    %c0_i32_0 = arith.constant 0 : i32
    %c0_i32_1 = arith.constant 0 : i32
    return %c0_i32, %c0_i32_0 : i32, i32
  }
  func.func @transform_8(%arg0: i32) -> (i32, i32) {
    %c0_i32 = arith.constant 0 : i32
    %c0_i32_0 = arith.constant 0 : i32
    %c0_i32_1 = arith.constant 0 : i32
    return %c0_i32, %c0_i32_0 : i32, i32
  }
  func.func @transform_9(%arg0: i32) -> (i32, i32) {
    %c0_i32 = arith.constant 0 : i32
    %c0_i32_0 = arith.constant 0 : i32
    %c0_i32_1 = arith.constant 0 : i32
    return %c0_i32, %c0_i32_0 : i32, i32
  }
  func.func @transform_10(%arg0: i32) -> (i32, i32) {
    %c0_i32 = arith.constant 0 : i32
    %c0_i32_0 = arith.constant 0 : i32
    %c0_i32_1 = arith.constant 0 : i32
    return %c0_i32, %c0_i32_0 : i32, i32
  }
  func.func @transform_11(%arg0: i32) -> (i32, i32) {
    %c0_i32 = arith.constant 0 : i32
    %c0_i32_0 = arith.constant 0 : i32
    %c0_i32_1 = arith.constant 0 : i32
    return %c0_i32, %c0_i32_0 : i32, i32
  }
  func.func @transform_12(%arg0: i32) -> (i32, i32) {
    %c0_i32 = arith.constant 0 : i32
    %c0_i32_0 = arith.constant 0 : i32
    %c0_i32_1 = arith.constant 0 : i32
    return %c0_i32, %c0_i32_0 : i32, i32
  }
  func.func @transform_13(%arg0: i32) -> (i32, i32) {
    %c0_i32 = arith.constant 0 : i32
    %c0_i32_0 = arith.constant 0 : i32
    %c0_i32_1 = arith.constant 0 : i32
    return %c0_i32, %c0_i32_0 : i32, i32
  }
  func.func @transform_14(%arg0: i32) -> i32 {
    %c0_i32 = arith.constant 0 : i32
    %c0_i32_0 = arith.constant 0 : i32
    return %c0_i32 : i32
  }
  func.func @transform_15(%arg0: i32) -> (i32, i32) {
    %c0_i32 = arith.constant 0 : i32
    %c0_i32_0 = arith.constant 0 : i32
    return %arg0, %c0_i32 : i32, i32
  }
}

</mosaic_0001>

<llo_original>
// kernel: tpu_custom_call.1
$region0: #{tpu_custom_call.1}
  #allocation0 [shape = 'u32[]', space=smem, size = 0x4, offset = 0x4, fixed_abs, tag = 'smem constant byte address 0x4 - core index']
  #allocation1 [shape = 'u32[144,128]{1,0:T(1,128)}', space=vmem, size = 0x12000, scoped, tag = 'internal scratch']
  #allocation2 [shape = 'f32[1]{0:T(128)S(6)}', space=smem, size = 0x200, scoped, tag = 'scoped memory for tpu_custom_call.1']
  %s0 = inlined_call_operand.hbm [shape: bf16[16,128], index: 0, kind: input, shape index: {}]
  %s1 = inlined_call_operand.hbm [shape: bf16[128,128], index: 1, kind: input, shape index: {}]
  %s2 = inlined_call_operand.vmem [shape: f32[1,128], index: 2, kind: input, shape index: {}]
  %s3 = inlined_call_operand.vmem [shape: f32[1,128], index: 3, kind: input, shape index: {}]
  %s4 = inlined_call_operand.vmem [shape: f32[1,128], index: 4, kind: input, shape index: {}]
  %s5 = inlined_call_operand.hbm [shape: bf16[128,128], index: 5, kind: input, shape index: {}]
  %s6 = inlined_call_operand.vmem [shape: f32[1,128], index: 6, kind: input, shape index: {}]
  %s7 = inlined_call_operand.vmem [shape: f32[1,128], index: 7, kind: input, shape index: {}]
  %s8 = inlined_call_operand.vmem [shape: f32[1,128], index: 8, kind: input, shape index: {}]
  %s9 = inlined_call_operand.hbm [shape: bf16[128,128], index: 9, kind: input, shape index: {}]
  %s10 = inlined_call_operand.vmem [shape: f32[1,128], index: 10, kind: input, shape index: {}]
  %s11 = inlined_call_operand.vmem [shape: f32[1,128], index: 11, kind: input, shape index: {}]
  %s12 = inlined_call_operand.vmem [shape: f32[1,128], index: 12, kind: input, shape index: {}]
  %s13 = inlined_call_operand.vmem [shape: f32[1,128], index: 13, kind: input, shape index: {}]
  %s14 = inlined_call_operand.<no memory space> [shape: f32[1], index: 14, kind: input, shape index: {}]
  %s15 = inlined_call_operand.hbm [shape: f32[16,128], index: 15, kind: output, shape index: {}]
  %s16 = sld [smem:[#allocation0]]
  $region86: #{tpu_custom_call.1} parent=0
    _
  %s18 = ssub.s32 1, %s16
  %s19 = scalar_select 0, %s18, %s16
  %20 = sst [smem:[#allocation2]] %s14
  $region1: #{tpu_custom_call.1} parent=0
    #allocation3 [shape = 'u8[4096]{0}', space=vmem, size = 0x1000, scoped, tag = 'input window, operand 0, single buffered']
    #allocation4 [shape = 's32[1]{0}', space=sflag, size = 0x4, scoped, tag = 'scoped memory for tpu_custom_call.1']
    #allocation5 [shape = 's32[1]{0}', space=sflag, size = 0x4, scoped, tag = 'scoped memory for tpu_custom_call.1']
    #allocation6 [shape = 'u8[32768]{0}', space=vmem, size = 0x8000, scoped, tag = 'input window, operand 1, single buffered']
    #allocation7 [shape = 's32[1]{0}', space=sflag, size = 0x4, scoped, tag = 'scoped memory for tpu_custom_call.1']
    #allocation8 [shape = 'u8[32768]{0}', space=vmem, size = 0x8000, scoped, tag = 'input window, operand 5, single buffered']
    #allocation9 [shape = 'u8[32768]{0}', space=vmem, size = 0x8000, scoped, tag = 'input window, operand 9, single buffered']
    #allocation10 [shape = 's32[1]{0}', space=sflag, size = 0x4, scoped, tag = 'scoped memory for tpu_custom_call.1']
    #allocation11 [shape = 'u8[8192]{0}', space=vmem, size = 0x2000, scoped, tag = 'output window, operand 0, single buffered']
    %21 = vsyncpa [#allocation4], 0
    %22 = vsyncpa [#allocation7], 0
    %23 = vsyncpa [#allocation10], 0
    %24 = vsyncpa [#allocation5], 0
    // Predicated region
    $region2: #{tpu_custom_call.1} parent=1 // pred_check
      _
    $region3: #{tpu_custom_call.1} parent=1 // pred_check_branch
      %26 = sbr.rel (0) target = $region5
    $region4: #{tpu_custom_call.1} parent=1 // pred_region
      %s28 = ssub.s32 128, 128
      %29 = vsyncadd [#allocation4], %s28
      %s30 = sshll.u32 [#allocation3], 4
      %s31 = int_to_ptr.vmem [resolvable:$true] %s30
      %36 = dma.hbm_to_vmem [thread:$0]  %s0, 128, %s31, [#allocation4], 64, 64, 4
    $region5: #{tpu_custom_call.1} parent=1 // pred_fallthru
      _
    // Predicated region
    $region6: #{tpu_custom_call.1} parent=1 // pred_check
      _
    $region7: #{tpu_custom_call.1} parent=1 // pred_check_branch
      %38 = sbr.rel (0) target = $region9
    $region8: #{tpu_custom_call.1} parent=1 // pred_region
      %s40 = ssub.s32 1024, 1024
      %41 = vsyncadd [#allocation7], %s40
      %s42 = sshll.u32 [#allocation6], 4
      %s43 = int_to_ptr.vmem [resolvable:$true] %s42
      %48 = dma.hbm_to_vmem [thread:$0]  %s1, 1024, %s43, [#allocation7], 64, 64, 4
    $region9: #{tpu_custom_call.1} parent=1 // pred_fallthru
      _
    // Predicated region
    $region10: #{tpu_custom_call.1} parent=1 // pred_check
      _
    $region11: #{tpu_custom_call.1} parent=1 // pred_check_branch
      %50 = sbr.rel (0) target = $region13
    $region12: #{tpu_custom_call.1} parent=1 // pred_region
      _
    $region13: #{tpu_custom_call.1} parent=1 // pred_fallthru
      _
    // Predicated region
    $region14: #{tpu_custom_call.1} parent=1 // pred_check
      _
    $region15: #{tpu_custom_call.1} parent=1 // pred_check_branch
      %52 = sbr.rel (0) target = $region17
    $region16: #{tpu_custom_call.1} parent=1 // pred_region
      _
    $region17: #{tpu_custom_call.1} parent=1 // pred_fallthru
      _
    // Predicated region
    $region18: #{tpu_custom_call.1} parent=1 // pred_check
      _
    $region19: #{tpu_custom_call.1} parent=1 // pred_check_branch
      %54 = sbr.rel (0) target = $region21
    $region20: #{tpu_custom_call.1} parent=1 // pred_region
      _
    $region21: #{tpu_custom_call.1} parent=1 // pred_fallthru
      _
    // Predicated region
    $region22: #{tpu_custom_call.1} parent=1 // pred_check
      _
    $region23: #{tpu_custom_call.1} parent=1 // pred_check_branch
      %56 = sbr.rel (0) target = $region25
    $region24: #{tpu_custom_call.1} parent=1 // pred_region
      %s58 = ssub.s32 1024, 1024
      %59 = vsyncadd [#allocation7], %s58
      %s60 = sshll.u32 [#allocation8], 4
      %s61 = int_to_ptr.vmem [resolvable:$true] %s60
      %66 = dma.hbm_to_vmem [thread:$0]  %s5, 1024, %s61, [#allocation7], 64, 64, 4
    $region25: #{tpu_custom_call.1} parent=1 // pred_fallthru
      _
    // Predicated region
    $region26: #{tpu_custom_call.1} parent=1 // pred_check
      _
    $region27: #{tpu_custom_call.1} parent=1 // pred_check_branch
      %68 = sbr.rel (0) target = $region29
    $region28: #{tpu_custom_call.1} parent=1 // pred_region
      _
    $region29: #{tpu_custom_call.1} parent=1 // pred_fallthru
      _
    // Predicated region
    $region30: #{tpu_custom_call.1} parent=1 // pred_check
      _
    $region31: #{tpu_custom_call.1} parent=1 // pred_check_branch
      %70 = sbr.rel (0) target = $region33
    $region32: #{tpu_custom_call.1} parent=1 // pred_region
      _
    $region33: #{tpu_custom_call.1} parent=1 // pred_fallthru
      _
    // Predicated region
    $region34: #{tpu_custom_call.1} parent=1 // pred_check
      _
    $region35: #{tpu_custom_call.1} parent=1 // pred_check_branch
      %72 = sbr.rel (0) target = $region37
    $region36: #{tpu_custom_call.1} parent=1 // pred_region
      _
    $region37: #{tpu_custom_call.1} parent=1 // pred_fallthru
      _
    // Predicated region
    $region38: #{tpu_custom_call.1} parent=1 // pred_check
      _
    $region39: #{tpu_custom_call.1} parent=1 // pred_check_branch
      %74 = sbr.rel (0) target = $region41
    $region40: #{tpu_custom_call.1} parent=1 // pred_region
      %s76 = ssub.s32 1024, 1024
      %77 = vsyncadd [#allocation10], %s76
      %s78 = sshll.u32 [#allocation9], 4
      %s79 = int_to_ptr.vmem [resolvable:$true] %s78
      %84 = dma.hbm_to_vmem [thread:$0]  %s9, 1024, %s79, [#allocation10], 64, 64, 4
    $region41: #{tpu_custom_call.1} parent=1 // pred_fallthru
      _
    // Predicated region
    $region42: #{tpu_custom_call.1} parent=1 // pred_check
      _
    $region43: #{tpu_custom_call.1} parent=1 // pred_check_branch
      %86 = sbr.rel (0) target = $region45
    $region44: #{tpu_custom_call.1} parent=1 // pred_region
      _
    $region45: #{tpu_custom_call.1} parent=1 // pred_fallthru
      _
    // Predicated region
    $region46: #{tpu_custom_call.1} parent=1 // pred_check
      _
    $region47: #{tpu_custom_call.1} parent=1 // pred_check_branch
      %88 = sbr.rel (0) target = $region49
    $region48: #{tpu_custom_call.1} parent=1 // pred_region
      _
    $region49: #{tpu_custom_call.1} parent=1 // pred_fallthru
      _
    // Predicated region
    $region50: #{tpu_custom_call.1} parent=1 // pred_check
      _
    $region51: #{tpu_custom_call.1} parent=1 // pred_check_branch
      %90 = sbr.rel (0) target = $region53
    $region52: #{tpu_custom_call.1} parent=1 // pred_region
      _
    $region53: #{tpu_custom_call.1} parent=1 // pred_fallthru
      _
    // Predicated region
    $region54: #{tpu_custom_call.1} parent=1 // pred_check
      _
    $region55: #{tpu_custom_call.1} parent=1 // pred_check_branch
      %92 = sbr.rel (0) target = $region57
    $region56: #{tpu_custom_call.1} parent=1 // pred_region
      _
    $region57: #{tpu_custom_call.1} parent=1 // pred_fallthru
      _
    // Predicated region
    $region58: #{tpu_custom_call.1} parent=1 // pred_check
      _
    $region59: #{tpu_custom_call.1} parent=1 // pred_check_branch
      %94 = sbr.rel (0) target = $region61
    $region60: #{tpu_custom_call.1} parent=1 // pred_region
      _
    $region61: #{tpu_custom_call.1} parent=1 // pred_fallthru
      _
    // Predicated region
    $region62: #{tpu_custom_call.1} parent=1 // pred_check
      _
    $region63: #{tpu_custom_call.1} parent=1 // pred_check_branch
      %96 = sbr.rel (0) target = $region65
    $region64: #{tpu_custom_call.1} parent=1 // pred_region
      %97 = dma.done [#allocation4], 128
    $region65: #{tpu_custom_call.1} parent=1 // pred_fallthru
      _
    // Predicated region
    $region66: #{tpu_custom_call.1} parent=1 // pred_check
      _
    $region67: #{tpu_custom_call.1} parent=1 // pred_check_branch
      %99 = sbr.rel (0) target = $region69
    $region68: #{tpu_custom_call.1} parent=1 // pred_region
      %100 = dma.done [#allocation7], 1024
    $region69: #{tpu_custom_call.1} parent=1 // pred_fallthru
      _
    // Predicated region
    $region70: #{tpu_custom_call.1} parent=1 // pred_check
      _
    $region71: #{tpu_custom_call.1} parent=1 // pred_check_branch
      %102 = sbr.rel (0) target = $region73
    $region72: #{tpu_custom_call.1} parent=1 // pred_region
      %103 = dma.done [#allocation7], 1024
    $region73: #{tpu_custom_call.1} parent=1 // pred_fallthru
      _
    // Predicated region
    $region74: #{tpu_custom_call.1} parent=1 // pred_check
      _
    $region75: #{tpu_custom_call.1} parent=1 // pred_check_branch
      %105 = sbr.rel (0) target = $region77
    $region76: #{tpu_custom_call.1} parent=1 // pred_region
      %106 = dma.done [#allocation10], 1024
    $region77: #{tpu_custom_call.1} parent=1 // pred_fallthru
      _
    %v108 = vld [vmem:[#allocation3] sm:$0xf]
    %v109 = vld [vmem:[#allocation3 + $0x4] sm:$0xf]
    %v110 = vld [vmem:[#allocation6] sm:$0xf]
    %v111 = vld [vmem:[#allocation6 + $0x4] sm:$0xf]
    %v112 = vld [vmem:[#allocation6 + $0x8] sm:$0xf]
    %v113 = vld [vmem:[#allocation6 + $0xc] sm:$0xf]
    %v114 = vld [vmem:[#allocation6 + $0x10] sm:$0xf]
    %v115 = vld [vmem:[#allocation6 + $0x14] sm:$0xf]
    %v116 = vld [vmem:[#allocation6 + $0x18] sm:$0xf]
    %v117 = vld [vmem:[#allocation6 + $0x1c] sm:$0xf]
    %v118 = vld [vmem:[#allocation6 + $0x20] sm:$0xf]
    %v119 = vld [vmem:[#allocation6 + $0x24] sm:$0xf]
    %v120 = vld [vmem:[#allocation6 + $0x28] sm:$0xf]
    %v121 = vld [vmem:[#allocation6 + $0x2c] sm:$0xf]
    %v122 = vld [vmem:[#allocation6 + $0x30] sm:$0xf]
    %v123 = vld [vmem:[#allocation6 + $0x34] sm:$0xf]
    %v124 = vld [vmem:[#allocation6 + $0x38] sm:$0xf]
    %v125 = vld [vmem:[#allocation6 + $0x3c] sm:$0xf]
    %v126 = vld [vmem:[%s2] sm:$0x1]
    %v128 = vlaneseq
    %v129 = vshrl.u32 %v128, 7
    %v130 = vsub.s32 0, %v129
    %v131 = vrot.slane %v126, %v130
    %v135 = vunpack.c.l.b16 %v108
    %v136 = vunpack.c.l.b16 %v109
    %v137 = vpack.c.b16 %v136, %v135
    %v155 = vunpack.c.l.b16 %v110
    %v156 = vunpack.c.l.b16 %v111
    %v157 = vunpack.c.l.b16 %v112
    %v158 = vunpack.c.l.b16 %v113
    %v159 = vunpack.c.l.b16 %v114
    %v160 = vunpack.c.l.b16 %v115
    %v161 = vunpack.c.l.b16 %v116
    %v162 = vunpack.c.l.b16 %v117
    %v163 = vunpack.c.l.b16 %v118
    %v164 = vunpack.c.l.b16 %v119
    %v165 = vunpack.c.l.b16 %v120
    %v166 = vunpack.c.l.b16 %v121
    %v167 = vunpack.c.l.b16 %v122
    %v168 = vunpack.c.l.b16 %v123
    %v169 = vunpack.c.l.b16 %v124
    %v170 = vunpack.c.l.b16 %v125
    %v171 = vpack.c.b16 %v156, %v155
    %v172 = vpack.c.b16 %v158, %v157
    %v173 = vpack.c.b16 %v160, %v159
    %v174 = vpack.c.b16 %v162, %v161
    %v175 = vpack.c.b16 %v164, %v163
    %v176 = vpack.c.b16 %v166, %v165
    %v177 = vpack.c.b16 %v168, %v167
    %v178 = vpack.c.b16 %v170, %v169
    %187 = vmatprep.subr.bf16.mxu0 0
    %188 = vmatpush1.bf16.msra.mxu0 %v178
    %189 = vmatprep.subr.bf16.mxu0 0
    %190 = vmatpush1.bf16.msra.mxu0 %v177
    %191 = vmatprep.subr.bf16.mxu0 0
    %192 = vmatpush1.bf16.msra.mxu0 %v176
    %193 = vmatprep.subr.bf16.mxu0 0
    %194 = vmatpush1.bf16.msra.mxu0 %v175
    %195 = vmatprep.subr.bf16.mxu0 0
    %196 = vmatpush1.bf16.msra.mxu0 %v174
    %197 = vmatprep.subr.bf16.mxu0 0
    %198 = vmatpush1.bf16.msra.mxu0 %v173
    %199 = vmatprep.subr.bf16.mxu0 0
    %200 = vmatpush1.bf16.msra.mxu0 %v172
    %201 = vmatprep.subr.bf16.mxu0 0
    %202 = vmatpush1.bf16.msra.mxu0 %v171
    %203 = vmatprep.subr.bf16.mxu0 0
    %204 = vmatpush2.bf16.msra.mxu0 0
    %205 = vmatprep.subr.bf16.mxu0 0
    %206 = vmatpush2.bf16.msra.mxu0 0
    %207 = vmatprep.subr.bf16.mxu0 0
    %208 = vmatpush2.bf16.msra.mxu0 0
    %209 = vmatprep.subr.bf16.mxu0 0
    %210 = vmatpush2.bf16.msra.mxu0 0
    %211 = vmatprep.subr.bf16.mxu0 0
    %212 = vmatpush2.bf16.msra.mxu0 0
    %213 = vmatprep.subr.bf16.mxu0 0
    %214 = vmatpush2.bf16.msra.mxu0 0
    %215 = vmatprep.subr.bf16.mxu0 0
    %216 = vmatpush2.bf16.msra.mxu0 0
    %217 = vmatprep.subr.bf16.mxu0 0
    %218 = vmatpush2.bf16.msra.mxu0 0
    %219 = vmatprep.mubr.bf16.mxu0 0
    %220 = vmatmul.mubr.bf16.gmra.mxu0 %v137
    %v221 = vpop.f32.mrf.mxu0
    %v222 = vadd.f32 %v131, %v221
    %v223 = vpop.f32.mrf.mxu0
    %v224 = vpop.f32.mrf.mxu0
    %v225 = vadd.f32 %v131, %v224
    %v226 = vpop.f32.mrf.mxu0
    %227 = vdwg.mxu0
    %228 = vadd.xlane.f32.xlu0 %v222
    %v229 = vpop.xlane.xlu0 %228
    %230 = vadd.xlane.f32.xlu0 %v225
    %v231 = vpop.xlane.xlu0 %230
    %v232 = vmul.f32 %v222, %v222
    %v233 = vmul.f32 %v225, %v225
    %234 = vadd.xlane.f32.xlu0 %v232
    %v235 = vpop.xlane.xlu0 %234
    %236 = vadd.xlane.f32.xlu0 %v233
    %v237 = vpop.xlane.xlu0 %236
    %v238 = vmul.f32 %v229, 0.03125
    %v239 = vmul.f32 %v231, 0.03125
    %v240 = vmul.f32 %v235, 0.03125
    %v241 = vmul.f32 %v237, 0.03125
    %v242 = vmul.f32 %v238, %v238
    %v243 = vmul.f32 %v239, %v239
    %v244 = vsub.f32 %v240, %v242
    %v245 = vsub.f32 %v241, %v243
    %v246 = vmax.f32 %v244, 0.0
    %v247 = vmax.f32 %v245, 0.0
    %v248 = vsub.f32 %v222, %v238
    %v249 = vsub.f32 %v225, %v239
    %v250 = vadd.f32 %v246, 1e-05
    %v251 = vadd.f32 %v247, 1e-05
    %v252 = vrsqrt.pop %v250
    %v253 = vrsqrt.pop %v251
    %v254 = vmul.f32 %v248, %v252
    %v255 = vmul.f32 %v249, %v253
    %v256 = vld [vmem:[%s3] sm:$0x1]
    %v258 = vlaneseq
    %v259 = vshrl.u32 %v258, 7
    %v260 = vsub.s32 0, %v259
    %v261 = vrot.slane %v256, %v260
    %v263 = vmul.f32 %v254, %v261
    %v264 = vmul.f32 %v255, %v261
    %v265 = vld [vmem:[%s4] sm:$0x1]
    %v267 = vlaneseq
    %v268 = vshrl.u32 %v267, 7
    %v269 = vsub.s32 0, %v268
    %v270 = vrot.slane %v265, %v269
    %v272 = vadd.f32 %v263, %v270
    %v273 = vadd.f32 %v264, %v270
    %v274 = vmax.f32 %v272, 0.0
    %v275 = vmax.f32 %v273, 0.0
    %v276 = vpack.c.bf16 %v275, %v274
    %v277 = vld [vmem:[#allocation8] sm:$0xf]
    %v278 = vld [vmem:[#allocation8 + $0x4] sm:$0xf]
    %v279 = vld [vmem:[#allocation8 + $0x8] sm:$0xf]
    %v280 = vld [vmem:[#allocation8 + $0xc] sm:$0xf]
    %v281 = vld [vmem:[#allocation8 + $0x10] sm:$0xf]
    %v282 = vld [vmem:[#allocation8 + $0x14] sm:$0xf]
    %v283 = vld [vmem:[#allocation8 + $0x18] sm:$0xf]
    %v284 = vld [vmem:[#allocation8 + $0x1c] sm:$0xf]
    %v285 = vld [vmem:[#allocation8 + $0x20] sm:$0xf]
    %v286 = vld [vmem:[#allocation8 + $0x24] sm:$0xf]
    %v287 = vld [vmem:[#allocation8 + $0x28] sm:$0xf]
    %v288 = vld [vmem:[#allocation8 + $0x2c] sm:$0xf]
    %v289 = vld [vmem:[#allocation8 + $0x30] sm:$0xf]
    %v290 = vld [vmem:[#allocation8 + $0x34] sm:$0xf]
    %v291 = vld [vmem:[#allocation8 + $0x38] sm:$0xf]
    %v292 = vld [vmem:[#allocation8 + $0x3c] sm:$0xf]
    %v293 = vld [vmem:[%s6] sm:$0x1]
    %v295 = vlaneseq
    %v296 = vshrl.u32 %v295, 7
    %v297 = vsub.s32 0, %v296
    %v298 = vrot.slane %v293, %v297
    %v316 = vunpack.c.l.b16 %v277
    %v317 = vunpack.c.l.b16 %v278
    %v318 = vunpack.c.l.b16 %v279
    %v319 = vunpack.c.l.b16 %v280
    %v320 = vunpack.c.l.b16 %v281
    %v321 = vunpack.c.l.b16 %v282
    %v322 = vunpack.c.l.b16 %v283
    %v323 = vunpack.c.l.b16 %v284
    %v324 = vunpack.c.l.b16 %v285
    %v325 = vunpack.c.l.b16 %v286
    %v326 = vunpack.c.l.b16 %v287
    %v327 = vunpack.c.l.b16 %v288
    %v328 = vunpack.c.l.b16 %v289
    %v329 = vunpack.c.l.b16 %v290
    %v330 = vunpack.c.l.b16 %v291
    %v331 = vunpack.c.l.b16 %v292
    %v332 = vpack.c.b16 %v317, %v316
    %v333 = vpack.c.b16 %v319, %v318
    %v334 = vpack.c.b16 %v321, %v320
    %v335 = vpack.c.b16 %v323, %v322
    %v336 = vpack.c.b16 %v325, %v324
    %v337 = vpack.c.b16 %v327, %v326
    %v338 = vpack.c.b16 %v329, %v328
    %v339 = vpack.c.b16 %v331, %v330
    %348 = vmatprep.subr.bf16.mxu0 0
    %349 = vmatpush1.bf16.msra.mxu0 %v339
    %350 = vmatprep.subr.bf16.mxu0 0
    %351 = vmatpush1.bf16.msra.mxu0 %v338
    %352 = vmatprep.subr.bf16.mxu0 0
    %353 = vmatpush1.bf16.msra.mxu0 %v337
    %354 = vmatprep.subr.bf16.mxu0 0
    %355 = vmatpush1.bf16.msra.mxu0 %v336
    %356 = vmatprep.subr.bf16.mxu0 0
    %357 = vmatpush1.bf16.msra.mxu0 %v335
    %358 = vmatprep.subr.bf16.mxu0 0
    %359 = vmatpush1.bf16.msra.mxu0 %v334
    %360 = vmatprep.subr.bf16.mxu0 0
    %361 = vmatpush1.bf16.msra.mxu0 %v333
    %362 = vmatprep.subr.bf16.mxu0 0
    %363 = vmatpush1.bf16.msra.mxu0 %v332
    %364 = vmatprep.subr.bf16.mxu0 0
    %365 = vmatpush2.bf16.msra.mxu0 0
    %366 = vmatprep.subr.bf16.mxu0 0
    %367 = vmatpush2.bf16.msra.mxu0 0
    %368 = vmatprep.subr.bf16.mxu0 0
    %369 = vmatpush2.bf16.msra.mxu0 0
    %370 = vmatprep.subr.bf16.mxu0 0
    %371 = vmatpush2.bf16.msra.mxu0 0
    %372 = vmatprep.subr.bf16.mxu0 0
    %373 = vmatpush2.bf16.msra.mxu0 0
    %374 = vmatprep.subr.bf16.mxu0 0
    %375 = vmatpush2.bf16.msra.mxu0 0
    %376 = vmatprep.subr.bf16.mxu0 0
    %377 = vmatpush2.bf16.msra.mxu0 0
    %378 = vmatprep.subr.bf16.mxu0 0
    %379 = vmatpush2.bf16.msra.mxu0 0
    %380 = vmatprep.mubr.bf16.mxu0 0
    %381 = vmatmul.mubr.bf16.gmra.mxu0 %v276
    %v382 = vpop.f32.mrf.mxu0
    %v383 = vadd.f32 %v298, %v382
    %v384 = vpop.f32.mrf.mxu0
    %v385 = vpop.f32.mrf.mxu0
    %v386 = vadd.f32 %v298, %v385
    %v387 = vpop.f32.mrf.mxu0
    %388 = vdwg.mxu0
    %389 = vadd.xlane.f32.xlu0 %v383
    %v390 = vpop.xlane.xlu0 %389
    %391 = vadd.xlane.f32.xlu0 %v386
    %v392 = vpop.xlane.xlu0 %391
    %v393 = vmul.f32 %v383, %v383
    %v394 = vmul.f32 %v386, %v386
    %395 = vadd.xlane.f32.xlu0 %v393
    %v396 = vpop.xlane.xlu0 %395
    %397 = vadd.xlane.f32.xlu0 %v394
    %v398 = vpop.xlane.xlu0 %397
    %v399 = vmul.f32 %v390, 0.03125
    %v400 = vmul.f32 %v392, 0.03125
    %v401 = vmul.f32 %v396, 0.03125
    %v402 = vmul.f32 %v398, 0.03125
    %v403 = vmul.f32 %v399, %v399
    %v404 = vmul.f32 %v400, %v400
    %v405 = vsub.f32 %v401, %v403
    %v406 = vsub.f32 %v402, %v404
    %v407 = vmax.f32 %v405, 0.0
    %v408 = vmax.f32 %v406, 0.0
    %v409 = vsub.f32 %v383, %v399
    %v410 = vsub.f32 %v386, %v400
    %v411 = vadd.f32 %v407, 1e-05
    %v412 = vadd.f32 %v408, 1e-05
    %v413 = vrsqrt.pop %v411
    %v414 = vrsqrt.pop %v412
    %v415 = vmul.f32 %v409, %v413
    %v416 = vmul.f32 %v410, %v414
    %v417 = vld [vmem:[%s7] sm:$0x1]
    %v419 = vlaneseq
    %v420 = vshrl.u32 %v419, 7
    %v421 = vsub.s32 0, %v420
    %v422 = vrot.slane %v417, %v421
    %v424 = vmul.f32 %v415, %v422
    %v425 = vmul.f32 %v416, %v422
    %v426 = vld [vmem:[%s8] sm:$0x1]
    %v428 = vlaneseq
    %v429 = vshrl.u32 %v428, 7
    %v430 = vsub.s32 0, %v429
    %v431 = vrot.slane %v426, %v430
    %v433 = vadd.f32 %v424, %v431
    %v434 = vadd.f32 %v425, %v431
    %v435 = vmax.f32 %v433, 0.0
    %v436 = vmax.f32 %v434, 0.0
    %v437 = vpack.c.bf16 %v436, %v435
    %v438 = vld [vmem:[#allocation9] sm:$0xf]
    %v439 = vld [vmem:[#allocation9 + $0x4] sm:$0xf]
    %v440 = vld [vmem:[#allocation9 + $0x8] sm:$0xf]
    %v441 = vld [vmem:[#allocation9 + $0xc] sm:$0xf]
    %v442 = vld [vmem:[#allocation9 + $0x10] sm:$0xf]
    %v443 = vld [vmem:[#allocation9 + $0x14] sm:$0xf]
    %v444 = vld [vmem:[#allocation9 + $0x18] sm:$0xf]
    %v445 = vld [vmem:[#allocation9 + $0x1c] sm:$0xf]
    %v446 = vld [vmem:[#allocation9 + $0x20] sm:$0xf]
    %v447 = vld [vmem:[#allocation9 + $0x24] sm:$0xf]
    %v448 = vld [vmem:[#allocation9 + $0x28] sm:$0xf]
    %v449 = vld [vmem:[#allocation9 + $0x2c] sm:$0xf]
    %v450 = vld [vmem:[#allocation9 + $0x30] sm:$0xf]
    %v451 = vld [vmem:[#allocation9 + $0x34] sm:$0xf]
    %v452 = vld [vmem:[#allocation9 + $0x38] sm:$0xf]
    %v453 = vld [vmem:[#allocation9 + $0x3c] sm:$0xf]
    %v454 = vld [vmem:[%s10] sm:$0x1]
    %v456 = vlaneseq
    %v457 = vshrl.u32 %v456, 7
    %v458 = vsub.s32 0, %v457
    %v459 = vrot.slane %v454, %v458
    %v477 = vunpack.c.l.b16 %v438
    %v478 = vunpack.c.l.b16 %v439
    %v479 = vunpack.c.l.b16 %v440
    %v480 = vunpack.c.l.b16 %v441
    %v481 = vunpack.c.l.b16 %v442
    %v482 = vunpack.c.l.b16 %v443
    %v483 = vunpack.c.l.b16 %v444
    %v484 = vunpack.c.l.b16 %v445
    %v485 = vunpack.c.l.b16 %v446
    %v486 = vunpack.c.l.b16 %v447
    %v487 = vunpack.c.l.b16 %v448
    %v488 = vunpack.c.l.b16 %v449
    %v489 = vunpack.c.l.b16 %v450
    %v490 = vunpack.c.l.b16 %v451
    %v491 = vunpack.c.l.b16 %v452
    %v492 = vunpack.c.l.b16 %v453
    %v493 = vpack.c.b16 %v478, %v477
    %v494 = vpack.c.b16 %v480, %v479
    %v495 = vpack.c.b16 %v482, %v481
    %v496 = vpack.c.b16 %v484, %v483
    %v497 = vpack.c.b16 %v486, %v485
    %v498 = vpack.c.b16 %v488, %v487
    %v499 = vpack.c.b16 %v490, %v489
    %v500 = vpack.c.b16 %v492, %v491
    %509 = vmatprep.subr.bf16.mxu0 0
    %510 = vmatpush1.bf16.msra.mxu0 %v500
    %511 = vmatprep.subr.bf16.mxu0 0
    %512 = vmatpush1.bf16.msra.mxu0 %v499
    %513 = vmatprep.subr.bf16.mxu0 0
    %514 = vmatpush1.bf16.msra.mxu0 %v498
    %515 = vmatprep.subr.bf16.mxu0 0
    %516 = vmatpush1.bf16.msra.mxu0 %v497
    %517 = vmatprep.subr.bf16.mxu0 0
    %518 = vmatpush1.bf16.msra.mxu0 %v496
    %519 = vmatprep.subr.bf16.mxu0 0
    %520 = vmatpush1.bf16.msra.mxu0 %v495
    %521 = vmatprep.subr.bf16.mxu0 0
    %522 = vmatpush1.bf16.msra.mxu0 %v494
    %523 = vmatprep.subr.bf16.mxu0 0
    %524 = vmatpush1.bf16.msra.mxu0 %v493
    %525 = vmatprep.subr.bf16.mxu0 0
    %526 = vmatpush2.bf16.msra.mxu0 0
    %527 = vmatprep.subr.bf16.mxu0 0
    %528 = vmatpush2.bf16.msra.mxu0 0
    %529 = vmatprep.subr.bf16.mxu0 0
    %530 = vmatpush2.bf16.msra.mxu0 0
    %531 = vmatprep.subr.bf16.mxu0 0
    %532 = vmatpush2.bf16.msra.mxu0 0
    %533 = vmatprep.subr.bf16.mxu0 0
    %534 = vmatpush2.bf16.msra.mxu0 0
    %535 = vmatprep.subr.bf16.mxu0 0
    %536 = vmatpush2.bf16.msra.mxu0 0
    %537 = vmatprep.subr.bf16.mxu0 0
    %538 = vmatpush2.bf16.msra.mxu0 0
    %539 = vmatprep.subr.bf16.mxu0 0
    %540 = vmatpush2.bf16.msra.mxu0 0
    %541 = vmatprep.mubr.bf16.mxu0 0
    %542 = vmatmul.mubr.bf16.gmra.mxu0 %v437
    %v543 = vpop.f32.mrf.mxu0
    %v544 = vadd.f32 %v459, %v543
    %v545 = vpop.f32.mrf.mxu0
    %v546 = vpop.f32.mrf.mxu0
    %v547 = vadd.f32 %v459, %v546
    %v548 = vpop.f32.mrf.mxu0
    %549 = vdwg.mxu0
    %550 = vadd.xlane.f32.xlu0 %v544
    %v551 = vpop.xlane.xlu0 %550
    %552 = vadd.xlane.f32.xlu0 %v547
    %v553 = vpop.xlane.xlu0 %552
    %v554 = vmul.f32 %v544, %v544
    %v555 = vmul.f32 %v547, %v547
    %556 = vadd.xlane.f32.xlu0 %v554
    %v557 = vpop.xlane.xlu0 %556
    %558 = vadd.xlane.f32.xlu0 %v555
    %v559 = vpop.xlane.xlu0 %558
    %v560 = vmul.f32 %v551, 0.03125
    %v561 = vmul.f32 %v553, 0.03125
    %v562 = vmul.f32 %v557, 0.03125
    %v563 = vmul.f32 %v559, 0.03125
    %v564 = vmul.f32 %v560, %v560
    %v565 = vmul.f32 %v561, %v561
    %v566 = vsub.f32 %v562, %v564
    %v567 = vsub.f32 %v563, %v565
    %v568 = vmax.f32 %v566, 0.0
    %v569 = vmax.f32 %v567, 0.0
    %v570 = vsub.f32 %v544, %v560
    %v571 = vsub.f32 %v547, %v561
    %v572 = vadd.f32 %v568, 1e-05
    %v573 = vadd.f32 %v569, 1e-05
    %v574 = vrsqrt.pop %v572
    %v575 = vrsqrt.pop %v573
    %v576 = vmul.f32 %v570, %v574
    %v577 = vmul.f32 %v571, %v575
    %v578 = vld [vmem:[%s11] sm:$0x1]
    %v580 = vlaneseq
    %v581 = vshrl.u32 %v580, 7
    %v582 = vsub.s32 0, %v581
    %v583 = vrot.slane %v578, %v582
    %v585 = vmul.f32 %v576, %v583
    %v586 = vmul.f32 %v577, %v583
    %v587 = vld [vmem:[%s12] sm:$0x1]
    %v589 = vlaneseq
    %v590 = vshrl.u32 %v589, 7
    %v591 = vsub.s32 0, %v590
    %v592 = vrot.slane %v587, %v591
    %v594 = vadd.f32 %v585, %v592
    %v595 = vadd.f32 %v586, %v592
    %v596 = vmax.f32 %v594, 0.0
    %v597 = vmax.f32 %v595, 0.0
    %v598 = vpack.c.bf16 %v597, %v596
    %v599 = vld [vmem:[%s13] sm:$0x1]
    %v600 = vunpack.c.l.bf16 %v598
    %v601 = vunpack.c.h.bf16 %v598
    %v603 = vlaneseq
    %v604 = vshrl.u32 %v603, 7
    %v605 = vsub.s32 0, %v604
    %v606 = vrot.slane %v599, %v605
    %v608 = vmul.f32 %v600, %v606
    %v609 = vmul.f32 %v601, %v606
    %610 = vadd.xlane.f32.xlu0 %v608
    %v611 = vpop.xlane.xlu0 %610
    %612 = vadd.xlane.f32.xlu0 %v609
    %v613 = vpop.xlane.xlu0 %612
    %s614 = sld [smem:[#allocation2]]
    %v615 = vstv %s614
    %v616 = vadd.f32 %v611, %v615
    %v617 = vadd.f32 %v613, %v615
    %v618 = vxor.u32 %v616, 2147483648
    %v619 = vxor.u32 %v617, 2147483648
    %v620 = vmul.f32 %v618, 1.442695
    %v621 = vpow.pop %v620
    %v622 = vmul.f32 %v619, 1.442695
    %v623 = vpow.pop %v622
    %v624 = vadd.f32 %v621, 1.0
    %v625 = vadd.f32 %v623, 1.0
    %v626 = vrcp.pop %v624
    %v627 = vmul.f32 1.0, %v626
    %v628 = vrcp.pop %v625
    %v629 = vmul.f32 1.0, %v628
    %630 = vst [vmem:[#allocation11] sm:$0xff] %v627
    %631 = vst [vmem:[#allocation11 + $0x8] sm:$0xff] %v629
    // Predicated region
    $region78: #{tpu_custom_call.1} parent=1 // pred_check
      _
    $region79: #{tpu_custom_call.1} parent=1 // pred_check_branch
      %633 = sbr.rel (0) target = $region81
    $region80: #{tpu_custom_call.1} parent=1 // pred_region
      %s635 = ssub.s32 256, 256
      %636 = vsyncadd [#allocation5], %s635
      %s637 = sshll.u32 [#allocation11], 4
      %s638 = int_to_ptr.vmem [resolvable:$true] %s637
      %643 = dma.vmem_to_hbm [thread:$0]  %s638, 256, %s15, [#allocation5], 128, 128, 8
    $region81: #{tpu_custom_call.1} parent=1 // pred_fallthru
      _
    // Predicated region
    $region82: #{tpu_custom_call.1} parent=1 // pred_check
      _
    $region83: #{tpu_custom_call.1} parent=1 // pred_check_branch
      %645 = sbr.rel (0) target = $region85
    $region84: #{tpu_custom_call.1} parent=1 // pred_region
      %646 = dma.done [#allocation5], 256
    $region85: #{tpu_custom_call.1} parent=1 // pred_fallthru
      _
    %647 = vsyncpa [#allocation4], 1
    %648 = vsyncpa [#allocation7], 1
    %649 = vsyncpa [#allocation10], 1
    %650 = vsyncpa [#allocation5], 1

// kernel: tpu_custom_call.1
$region0: #{tpu_custom_call.1}
  #allocation0 [shape = 'u32[]', space=smem, size = 0x4, offset = 0x4, fixed_abs, tag = 'smem constant byte address 0x4 - core index']
  #allocation1 [shape = 'u32[144,128]{1,0:T(1,128)}', space=vmem, size = 0x12000, scoped, tag = 'internal scratch']
  #allocation2 [shape = 'f32[1]{0:T(128)S(6)}', space=smem, size = 0x200, scoped, tag = 'scoped memory for tpu_custom_call.1']
  %s0 = inlined_call_operand.hbm [shape: bf16[16,128], index: 0, kind: input, shape index: {}]
  %s1 = inlined_call_operand.hbm [shape: bf16[128,128], index: 1, kind: input, shape index: {}]
  %s2 = inlined_call_operand.vmem [shape: f32[1,128], index: 2, kind: input, shape index: {}]
  %s3 = inlined_call_operand.vmem [shape: f32[1,128], index: 3, kind: input, shape index: {}]
  %s4 = inlined_call_operand.vmem [shape: f32[1,128], index: 4, kind: input, shape index: {}]
  %s5 = inlined_call_operand.hbm [shape: bf16[128,128], index: 5, kind: input, shape index: {}]
  %s6 = inlined_call_operand.vmem [shape: f32[1,128], index: 6, kind: input, shape index: {}]
  %s7 = inlined_call_operand.vmem [shape: f32[1,128], index: 7, kind: input, shape index: {}]
  %s8 = inlined_call_operand.vmem [shape: f32[1,128], index: 8, kind: input, shape index: {}]
  %s9 = inlined_call_operand.hbm [shape: bf16[128,128], index: 9, kind: input, shape index: {}]
  %s10 = inlined_call_operand.vmem [shape: f32[1,128], index: 10, kind: input, shape index: {}]
  %s11 = inlined_call_operand.vmem [shape: f32[1,128], index: 11, kind: input, shape index: {}]
  %s12 = inlined_call_operand.vmem [shape: f32[1,128], index: 12, kind: input, shape index: {}]
  %s13 = inlined_call_operand.vmem [shape: f32[1,128], index: 13, kind: input, shape index: {}]
  %s14 = inlined_call_operand.<no memory space> [shape: f32[1], index: 14, kind: input, shape index: {}]
  %s15 = inlined_call_operand.hbm [shape: f32[16,128], index: 15, kind: output, shape index: {}]
  %s16 = sld [smem:[#allocation0]]
  $region86: #{tpu_custom_call.1} parent=0
    _
  %s18 = ssub.s32 1, %s16
  %s19 = scalar_select 0, %s18, %s16
  %20 = sst [smem:[#allocation2]] %s14
  $region1: #{tpu_custom_call.1} parent=0
    #allocation3 [shape = 'u8[4096]{0}', space=vmem, size = 0x1000, scoped, tag = 'input window, operand 0, single buffered']
    #allocation4 [shape = 's32[1]{0}', space=sflag, size = 0x4, scoped, tag = 'scoped memory for tpu_custom_call.1']
    #allocation5 [shape = 's32[1]{0}', space=sflag, size = 0x4, scoped, tag = 'scoped memory for tpu_custom_call.1']
    #allocation6 [shape = 'u8[32768]{0}', space=vmem, size = 0x8000, scoped, tag = 'input window, operand 1, single buffered']
    #allocation7 [shape = 's32[1]{0}', space=sflag, size = 0x4, scoped, tag = 'scoped memory for tpu_custom_call.1']
    #allocation8 [shape = 'u8[32768]{0}', space=vmem, size = 0x8000, scoped, tag = 'input window, operand 5, single buffered']
    #allocation9 [shape = 'u8[32768]{0}', space=vmem, size = 0x8000, scoped, tag = 'input window, operand 9, single buffered']
    #allocation10 [shape = 's32[1]{0}', space=sflag, size = 0x4, scoped, tag = 'scoped memory for tpu_custom_call.1']
    #allocation11 [shape = 'u8[8192]{0}', space=vmem, size = 0x2000, scoped, tag = 'output window, operand 0, single buffered']
    %21 = vsyncpa [#allocation4], 0
    %22 = vsyncpa [#allocation7], 0
    %23 = vsyncpa [#allocation10], 0
    %24 = vsyncpa [#allocation5], 0
    // Predicated region
    $region2: #{tpu_custom_call.1} parent=1 // pred_check
      _
    $region3: #{tpu_custom_call.1} parent=1 // pred_check_branch
      %26 = sbr.rel (0) target = $region5
    $region4: #{tpu_custom_call.1} parent=1 // pred_region
      %s28 = ssub.s32 128, 128
      %29 = vsyncadd [#allocation4], %s28
      %s30 = sshll.u32 [#allocation3], 4
      %s31 = int_to_ptr.vmem [resolvable:$true] %s30
      %36 = dma.hbm_to_vmem [thread:$0]  %s0, 128, %s31, [#allocation4], 64, 64, 4
    $region5: #{tpu_custom_call.1} parent=1 // pred_fallthru
      _
    // Predicated region
    $region6: #{tpu_custom_call.1} parent=1 // pred_check
      _
    $region7: #{tpu_custom_call.1} parent=1 // pred_check_branch
      %38 = sbr.rel (0) target = $region9
    $region8: #{tpu_custom_call.1} parent=1 // pred_region
      %s40 = ssub.s32 1024, 1024
      %41 = vsyncadd [#allocation7], %s40
      %s42 = sshll.u32 [#allocation6], 4
      %s43 = int_to_ptr.vmem [resolvable:$true] %s42
      %48 = dma.hbm_to_vmem [thread:$0]  %s1, 1024, %s43, [#allocation7], 64, 64, 4
    $region9: #{tpu_custom_call.1} parent=1 // pred_fallthru
      _
    // Predicated region
    $region10: #{tpu_custom_call.1} parent=1 // pred_check
      _
    $region11: #{tpu_custom_call.1} parent=1 // pred_check_branch
      %50 = sbr.rel (0) target = $region13
    $region12: #{tpu_custom_call.1} parent=1 // pred_region
      _
    $region13: #{tpu_custom_call.1} parent=1 // pred_fallthru
      _
    // Predicated region
    $region14: #{tpu_custom_call.1} parent=1 // pred_check
      _
    $region15: #{tpu_custom_call.1} parent=1 // pred_check_branch
      %52 = sbr.rel (0) target = $region17
    $region16: #{tpu_custom_call.1} parent=1 // pred_region
      _
    $region17: #{tpu_custom_call.1} parent=1 // pred_fallthru
      _
    // Predicated region
    $region18: #{tpu_custom_call.1} parent=1 // pred_check
      _
    $region19: #{tpu_custom_call.1} parent=1 // pred_check_branch
      %54 = sbr.rel (0) target = $region21
    $region20: #{tpu_custom_call.1} parent=1 // pred_region
      _
    $region21: #{tpu_custom_call.1} parent=1 // pred_fallthru
      _
    // Predicated region
    $region22: #{tpu_custom_call.1} parent=1 // pred_check
      _
    $region23: #{tpu_custom_call.1} parent=1 // pred_check_branch
      %56 = sbr.rel (0) target = $region25
    $region24: #{tpu_custom_call.1} parent=1 // pred_region
      %s58 = ssub.s32 1024, 1024
      %59 = vsyncadd [#allocation7], %s58
      %s60 = sshll.u32 [#allocation8], 4
      %s61 = int_to_ptr.vmem [resolvable:$true] %s60
      %66 = dma.hbm_to_vmem [thread:$0]  %s5, 1024, %s61, [#allocation7], 64, 64, 4
    $region25: #{tpu_custom_call.1} parent=1 // pred_fallthru
      _
    // Predicated region
    $region26: #{tpu_custom_call.1} parent=1 // pred_check
      _
    $region27: #{tpu_custom_call.1} parent=1 // pred_check_branch
      %68 = sbr.rel (0) target = $region29
    $region28: #{tpu_custom_call.1} parent=1 // pred_region
      _
    $region29: #{tpu_custom_call.1} parent=1 // pred_fallthru
      _
    // Predicated region
    $region30: #{tpu_custom_call.1} parent=1 // pred_check
      _
    $region31: #{tpu_custom_call.1} parent=1 // pred_check_branch
      %70 = sbr.rel (0) target = $region33
    $region32: #{tpu_custom_call.1} parent=1 // pred_region
      _
    $region33: #{tpu_custom_call.1} parent=1 // pred_fallthru
      _
    // Predicated region
    $region34: #{tpu_custom_call.1} parent=1 // pred_check
      _
    $region35: #{tpu_custom_call.1} parent=1 // pred_check_branch
      %72 = sbr.rel (0) target = $region37
    $region36: #{tpu_custom_call.1} parent=1 // pred_region
      _
    $region37: #{tpu_custom_call.1} parent=1 // pred_fallthru
      _
    // Predicated region
    $region38: #{tpu_custom_call.1} parent=1 // pred_check
      _
    $region39: #{tpu_custom_call.1} parent=1 // pred_check_branch
      %74 = sbr.rel (0) target = $region41
    $region40: #{tpu_custom_call.1} parent=1 // pred_region
      %s76 = ssub.s32 1024, 1024
      %77 = vsyncadd [#allocation10], %s76
      %s78 = sshll.u32 [#allocation9], 4
      %s79 = int_to_ptr.vmem [resolvable:$true] %s78
      %84 = dma.hbm_to_vmem [thread:$0]  %s9, 1024, %s79, [#allocation10], 64, 64, 4
    $region41: #{tpu_custom_call.1} parent=1 // pred_fallthru
      _
    // Predicated region
    $region42: #{tpu_custom_call.1} parent=1 // pred_check
      _
    $region43: #{tpu_custom_call.1} parent=1 // pred_check_branch
      %86 = sbr.rel (0) target = $region45
    $region44: #{tpu_custom_call.1} parent=1 // pred_region
      _
    $region45: #{tpu_custom_call.1} parent=1 // pred_fallthru
      _
    // Predicated region
    $region46: #{tpu_custom_call.1} parent=1 // pred_check
      _
    $region47: #{tpu_custom_call.1} parent=1 // pred_check_branch
      %88 = sbr.rel (0) target = $region49
    $region48: #{tpu_custom_call.1} parent=1 // pred_region
      _
    $region49: #{tpu_custom_call.1} parent=1 // pred_fallthru
      _
    // Predicated region
    $region50: #{tpu_custom_call.1} parent=1 // pred_check
      _
    $region51: #{tpu_custom_call.1} parent=1 // pred_check_branch
      %90 = sbr.rel (0) target = $region53
    $region52: #{tpu_custom_call.1} parent=1 // pred_region
      _
    $region53: #{tpu_custom_call.1} parent=1 // pred_fallthru
      _
    // Predicated region
    $region54: #{tpu_custom_call.1} parent=1 // pred_check
      _
    $region55: #{tpu_custom_call.1} parent=1 // pred_check_branch
      %92 = sbr.rel (0) target = $region57
    $region56: #{tpu_custom_call.1} parent=1 // pred_region
      _
    $region57: #{tpu_custom_call.1} parent=1 // pred_fallthru
      _
    // Predicated region
    $region58: #{tpu_custom_call.1} parent=1 // pred_check
      _
    $region59: #{tpu_custom_call.1} parent=1 // pred_check_branch
      %94 = sbr.rel (0) target = $region61
    $region60: #{tpu_custom_call.1} parent=1 // pred_region
      _
    $region61: #{tpu_custom_call.1} parent=1 // pred_fallthru
      _
    // Predicated region
    $region62: #{tpu_custom_call.1} parent=1 // pred_check
      _
    $region63: #{tpu_custom_call.1} parent=1 // pred_check_branch
      %96 = sbr.rel (0) target = $region65
    $region64: #{tpu_custom_call.1} parent=1 // pred_region
      %97 = dma.done [#allocation4], 128
    $region65: #{tpu_custom_call.1} parent=1 // pred_fallthru
      _
    // Predicated region
    $region66: #{tpu_custom_call.1} parent=1 // pred_check
      _
    $region67: #{tpu_custom_call.1} parent=1 // pred_check_branch
      %99 = sbr.rel (0) target = $region69
    $region68: #{tpu_custom_call.1} parent=1 // pred_region
      %100 = dma.done [#allocation7], 1024
    $region69: #{tpu_custom_call.1} parent=1 // pred_fallthru
      _
    // Predicated region
    $region70: #{tpu_custom_call.1} parent=1 // pred_check
      _
    $region71: #{tpu_custom_call.1} parent=1 // pred_check_branch
      %102 = sbr.rel (0) target = $region73
    $region72: #{tpu_custom_call.1} parent=1 // pred_region
      %103 = dma.done [#allocation7], 1024
    $region73: #{tpu_custom_call.1} parent=1 // pred_fallthru
      _
    // Predicated region
    $region74: #{tpu_custom_call.1} parent=1 // pred_check
      _
    $region75: #{tpu_custom_call.1} parent=1 // pred_check_branch
      %105 = sbr.rel (0) target = $region77
    $region76: #{tpu_custom_call.1} parent=1 // pred_region
      %106 = dma.done [#allocation10], 1024
    $region77: #{tpu_custom_call.1} parent=1 // pred_fallthru
      _
    %v108 = vld [vmem:[#allocation3] sm:$0xf]
    %v109 = vld [vmem:[#allocation3 + $0x4] sm:$0xf]
    %v110 = vld [vmem:[#allocation6] sm:$0xf]
    %v111 = vld [vmem:[#allocation6 + $0x4] sm:$0xf]
    %v112 = vld [vmem:[#allocation6 + $0x8] sm:$0xf]
    %v113 = vld [vmem:[#allocation6 + $0xc] sm:$0xf]
    %v114 = vld [vmem:[#allocation6 + $0x10] sm:$0xf]
    %v115 = vld [vmem:[#allocation6 + $0x14] sm:$0xf]
    %v116 = vld [vmem:[#allocation6 + $0x18] sm:$0xf]
    %v117 = vld [vmem:[#allocation6 + $0x1c] sm:$0xf]
    %v118 = vld [vmem:[#allocation6 + $0x20] sm:$0xf]
    %v119 = vld [vmem:[#allocation6 + $0x24] sm:$0xf]
    %v120 = vld [vmem:[#allocation6 + $0x28] sm:$0xf]
    %v121 = vld [vmem:[#allocation6 + $0x2c] sm:$0xf]
    %v122 = vld [vmem:[#allocation6 + $0x30] sm:$0xf]
    %v123 = vld [vmem:[#allocation6 + $0x34] sm:$0xf]
    %v124 = vld [vmem:[#allocation6 + $0x38] sm:$0xf]
    %v125 = vld [vmem:[#allocation6 + $0x3c] sm:$0xf]
    %v126 = vld [vmem:[%s2] sm:$0x1]
    %v128 = vlaneseq
    %v129 = vshrl.u32 %v128, 7
    %v130 = vsub.s32 0, %v129
    %v131 = vrot.slane %v126, %v130
    %v135 = vunpack.c.l.b16 %v108
    %v136 = vunpack.c.l.b16 %v109
    %v137 = vpack.c.b16 %v136, %v135
    %v155 = vunpack.c.l.b16 %v110
    %v156 = vunpack.c.l.b16 %v111
    %v157 = vunpack.c.l.b16 %v112
    %v158 = vunpack.c.l.b16 %v113
    %v159 = vunpack.c.l.b16 %v114
    %v160 = vunpack.c.l.b16 %v115
    %v161 = vunpack.c.l.b16 %v116
    %v162 = vunpack.c.l.b16 %v117
    %v163 = vunpack.c.l.b16 %v118
    %v164 = vunpack.c.l.b16 %v119
    %v165 = vunpack.c.l.b16 %v120
    %v166 = vunpack.c.l.b16 %v121
    %v167 = vunpack.c.l.b16 %v122
    %v168 = vunpack.c.l.b16 %v123
    %v169 = vunpack.c.l.b16 %v124
    %v170 = vunpack.c.l.b16 %v125
    %v171 = vpack.c.b16 %v156, %v155
    %v172 = vpack.c.b16 %v158, %v157
    %v173 = vpack.c.b16 %v160, %v159
    %v174 = vpack.c.b16 %v162, %v161
    %v175 = vpack.c.b16 %v164, %v163
    %v176 = vpack.c.b16 %v166, %v165
    %v177 = vpack.c.b16 %v168, %v167
    %v178 = vpack.c.b16 %v170, %v169
    %187 = vmatprep.subr.bf16.mxu0 0
    %188 = vmatpush1.bf16.msra.mxu0 %v178
    %189 = vmatprep.subr.bf16.mxu0 0
    %190 = vmatpush1.bf16.msra.mxu0 %v177
    %191 = vmatprep.subr.bf16.mxu0 0
    %192 = vmatpush1.bf16.msra.mxu0 %v176
    %193 = vmatprep.subr.bf16.mxu0 0
    %194 = vmatpush1.bf16.msra.mxu0 %v175
    %195 = vmatprep.subr.bf16.mxu0 0
    %196 = vmatpush1.bf16.msra.mxu0 %v174
    %197 = vmatprep.subr.bf16.mxu0 0
    %198 = vmatpush1.bf16.msra.mxu0 %v173
    %199 = vmatprep.subr.bf16.mxu0 0
    %200 = vmatpush1.bf16.msra.mxu0 %v172
    %201 = vmatprep.subr.bf16.mxu0 0
    %202 = vmatpush1.bf16.msra.mxu0 %v171
    %203 = vmatprep.subr.bf16.mxu0 0
    %204 = vmatpush2.bf16.msra.mxu0 0
    %205 = vmatprep.subr.bf16.mxu0 0
    %206 = vmatpush2.bf16.msra.mxu0 0
    %207 = vmatprep.subr.bf16.mxu0 0
    %208 = vmatpush2.bf16.msra.mxu0 0
    %209 = vmatprep.subr.bf16.mxu0 0
    %210 = vmatpush2.bf16.msra.mxu0 0
    %211 = vmatprep.subr.bf16.mxu0 0
    %212 = vmatpush2.bf16.msra.mxu0 0
    %213 = vmatprep.subr.bf16.mxu0 0
    %214 = vmatpush2.bf16.msra.mxu0 0
    %215 = vmatprep.subr.bf16.mxu0 0
    %216 = vmatpush2.bf16.msra.mxu0 0
    %217 = vmatprep.subr.bf16.mxu0 0
    %218 = vmatpush2.bf16.msra.mxu0 0
    %219 = vmatprep.mubr.bf16.mxu0 0
    %220 = vmatmul.mubr.bf16.gmra.mxu0 %v137
    %v221 = vpop.f32.mrf.mxu0
    %v222 = vadd.f32 %v131, %v221
    %v223 = vpop.f32.mrf.mxu0
    %v224 = vpop.f32.mrf.mxu0
    %v225 = vadd.f32 %v131, %v224
    %v226 = vpop.f32.mrf.mxu0
    %227 = vdwg.mxu0
    %228 = vadd.xlane.f32.xlu0 %v222
    %v229 = vpop.xlane.xlu0 %228
    %230 = vadd.xlane.f32.xlu0 %v225
    %v231 = vpop.xlane.xlu0 %230
    %v232 = vmul.f32 %v222, %v222
    %v233 = vmul.f32 %v225, %v225
    %234 = vadd.xlane.f32.xlu0 %v232
    %v235 = vpop.xlane.xlu0 %234
    %236 = vadd.xlane.f32.xlu0 %v233
    %v237 = vpop.xlane.xlu0 %236
    %v238 = vmul.f32 %v229, 0.03125
    %v239 = vmul.f32 %v231, 0.03125
    %v240 = vmul.f32 %v235, 0.03125
    %v241 = vmul.f32 %v237, 0.03125
    %v242 = vmul.f32 %v238, %v238
    %v243 = vmul.f32 %v239, %v239
    %v244 = vsub.f32 %v240, %v242
    %v245 = vsub.f32 %v241, %v243
    %v246 = vmax.f32 %v244, 0.0
    %v247 = vmax.f32 %v245, 0.0
    %v248 = vsub.f32 %v222, %v238
    %v249 = vsub.f32 %v225, %v239
    %v250 = vadd.f32 %v246, 1e-05
    %v251 = vadd.f32 %v247, 1e-05
    %v252 = vrsqrt.pop %v250
    %v253 = vrsqrt.pop %v251
    %v254 = vmul.f32 %v248, %v252
    %v255 = vmul.f32 %v249, %v253
    %v256 = vld [vmem:[%s3] sm:$0x1]
    %v258 = vlaneseq
    %v259 = vshrl.u32 %v258, 7
    %v260 = vsub.s32 0, %v259
    %v261 = vrot.slane %v256, %v260
    %v263 = vmul.f32 %v254, %v261
    %v264 = vmul.f32 %v255, %v261
    %v265 = vld [vmem:[%s4] sm:$0x1]
    %v267 = vlaneseq
    %v268 = vshrl.u32 %v267, 7
    %v269 = vsub.s32 0, %v268
    %v270 = vrot.slane %v265, %v269
    %v272 = vadd.f32 %v263, %v270
    %v273 = vadd.f32 %v264, %v270
    %v274 = vmax.f32 %v272, 0.0
    %v275 = vmax.f32 %v273, 0.0
    %v276 = vpack.c.bf16 %v275, %v274
    %v277 = vld [vmem:[#allocation8] sm:$0xf]
    %v278 = vld [vmem:[#allocation8 + $0x4] sm:$0xf]
    %v279 = vld [vmem:[#allocation8 + $0x8] sm:$0xf]
    %v280 = vld [vmem:[#allocation8 + $0xc] sm:$0xf]
    %v281 = vld [vmem:[#allocation8 + $0x10] sm:$0xf]
    %v282 = vld [vmem:[#allocation8 + $0x14] sm:$0xf]
    %v283 = vld [vmem:[#allocation8 + $0x18] sm:$0xf]
    %v284 = vld [vmem:[#allocation8 + $0x1c] sm:$0xf]
    %v285 = vld [vmem:[#allocation8 + $0x20] sm:$0xf]
    %v286 = vld [vmem:[#allocation8 + $0x24] sm:$0xf]
    %v287 = vld [vmem:[#allocation8 + $0x28] sm:$0xf]
    %v288 = vld [vmem:[#allocation8 + $0x2c] sm:$0xf]
    %v289 = vld [vmem:[#allocation8 + $0x30] sm:$0xf]
    %v290 = vld [vmem:[#allocation8 + $0x34] sm:$0xf]
    %v291 = vld [vmem:[#allocation8 + $0x38] sm:$0xf]
    %v292 = vld [vmem:[#allocation8 + $0x3c] sm:$0xf]
    %v293 = vld [vmem:[%s6] sm:$0x1]
    %v295 = vlaneseq
    %v296 = vshrl.u32 %v295, 7
    %v297 = vsub.s32 0, %v296
    %v298 = vrot.slane %v293, %v297
    %v316 = vunpack.c.l.b16 %v277
    %v317 = vunpack.c.l.b16 %v278
    %v318 = vunpack.c.l.b16 %v279
    %v319 = vunpack.c.l.b16 %v280
    %v320 = vunpack.c.l.b16 %v281
    %v321 = vunpack.c.l.b16 %v282
    %v322 = vunpack.c.l.b16 %v283
    %v323 = vunpack.c.l.b16 %v284
    %v324 = vunpack.c.l.b16 %v285
    %v325 = vunpack.c.l.b16 %v286
    %v326 = vunpack.c.l.b16 %v287
    %v327 = vunpack.c.l.b16 %v288
    %v328 = vunpack.c.l.b16 %v289
    %v329 = vunpack.c.l.b16 %v290
    %v330 = vunpack.c.l.b16 %v291
    %v331 = vunpack.c.l.b16 %v292
    %v332 = vpack.c.b16 %v317, %v316
    %v333 = vpack.c.b16 %v319, %v318
    %v334 = vpack.c.b16 %v321, %v320
    %v335 = vpack.c.b16 %v323, %v322
    %v336 = vpack.c.b16 %v325, %v324
    %v337 = vpack.c.b16 %v327, %v326
    %v338 = vpack.c.b16 %v329, %v328
    %v339 = vpack.c.b16 %v331, %v330
    %348 = vmatprep.subr.bf16.mxu0 0
    %349 = vmatpush1.bf16.msra.mxu0 %v339
    %350 = vmatprep.subr.bf16.mxu0 0
    %351 = vmatpush1.bf16.msra.mxu0 %v338
    %352 = vmatprep.subr.bf16.mxu0 0
    %353 = vmatpush1.bf16.msra.mxu0 %v337
    %354 = vmatprep.subr.bf16.mxu0 0
    %355 = vmatpush1.bf16.msra.mxu0 %v336
    %356 = vmatprep.subr.bf16.mxu0 0
    %357 = vmatpush1.bf16.msra.mxu0 %v335
    %358 = vmatprep.subr.bf16.mxu0 0
    %359 = vmatpush1.bf16.msra.mxu0 %v334
    %360 = vmatprep.subr.bf16.mxu0 0
    %361 = vmatpush1.bf16.msra.mxu0 %v333
    %362 = vmatprep.subr.bf16.mxu0 0
    %363 = vmatpush1.bf16.msra.mxu0 %v332
    %364 = vmatprep.subr.bf16.mxu0 0
    %365 = vmatpush2.bf16.msra.mxu0 0
    %366 = vmatprep.subr.bf16.mxu0 0
    %367 = vmatpush2.bf16.msra.mxu0 0
    %368 = vmatprep.subr.bf16.mxu0 0
    %369 = vmatpush2.bf16.msra.mxu0 0
    %370 = vmatprep.subr.bf16.mxu0 0
    %371 = vmatpush2.bf16.msra.mxu0 0
    %372 = vmatprep.subr.bf16.mxu0 0
    %373 = vmatpush2.bf16.msra.mxu0 0
    %374 = vmatprep.subr.bf16.mxu0 0
    %375 = vmatpush2.bf16.msra.mxu0 0
    %376 = vmatprep.subr.bf16.mxu0 0
    %377 = vmatpush2.bf16.msra.mxu0 0
    %378 = vmatprep.subr.bf16.mxu0 0
    %379 = vmatpush2.bf16.msra.mxu0 0
    %380 = vmatprep.mubr.bf16.mxu0 0
    %381 = vmatmul.mubr.bf16.gmra.mxu0 %v276
    %v382 = vpop.f32.mrf.mxu0
    %v383 = vadd.f32 %v298, %v382
    %v384 = vpop.f32.mrf.mxu0
    %v385 = vpop.f32.mrf.mxu0
    %v386 = vadd.f32 %v298, %v385
    %v387 = vpop.f32.mrf.mxu0
    %388 = vdwg.mxu0
    %389 = vadd.xlane.f32.xlu0 %v383
    %v390 = vpop.xlane.xlu0 %389
    %391 = vadd.xlane.f32.xlu0 %v386
    %v392 = vpop.xlane.xlu0 %391
    %v393 = vmul.f32 %v383, %v383
    %v394 = vmul.f32 %v386, %v386
    %395 = vadd.xlane.f32.xlu0 %v393
    %v396 = vpop.xlane.xlu0 %395
    %397 = vadd.xlane.f32.xlu0 %v394
    %v398 = vpop.xlane.xlu0 %397
    %v399 = vmul.f32 %v390, 0.03125
    %v400 = vmul.f32 %v392, 0.03125
    %v401 = vmul.f32 %v396, 0.03125
    %v402 = vmul.f32 %v398, 0.03125
    %v403 = vmul.f32 %v399, %v399
    %v404 = vmul.f32 %v400, %v400
    %v405 = vsub.f32 %v401, %v403
    %v406 = vsub.f32 %v402, %v404
    %v407 = vmax.f32 %v405, 0.0
    %v408 = vmax.f32 %v406, 0.0
    %v409 = vsub.f32 %v383, %v399
    %v410 = vsub.f32 %v386, %v400
    %v411 = vadd.f32 %v407, 1e-05
    %v412 = vadd.f32 %v408, 1e-05
    %v413 = vrsqrt.pop %v411
    %v414 = vrsqrt.pop %v412
    %v415 = vmul.f32 %v409, %v413
    %v416 = vmul.f32 %v410, %v414
    %v417 = vld [vmem:[%s7] sm:$0x1]
    %v419 = vlaneseq
    %v420 = vshrl.u32 %v419, 7
    %v421 = vsub.s32 0, %v420
    %v422 = vrot.slane %v417, %v421
    %v424 = vmul.f32 %v415, %v422
    %v425 = vmul.f32 %v416, %v422
    %v426 = vld [vmem:[%s8] sm:$0x1]
    %v428 = vlaneseq
    %v429 = vshrl.u32 %v428, 7
    %v430 = vsub.s32 0, %v429
    %v431 = vrot.slane %v426, %v430
    %v433 = vadd.f32 %v424, %v431
    %v434 = vadd.f32 %v425, %v431
    %v435 = vmax.f32 %v433, 0.0
    %v436 = vmax.f32 %v434, 0.0
    %v437 = vpack.c.bf16 %v436, %v435
    %v438 = vld [vmem:[#allocation9] sm:$0xf]
    %v439 = vld [vmem:[#allocation9 + $0x4] sm:$0xf]
    %v440 = vld [vmem:[#allocation9 + $0x8] sm:$0xf]
    %v441 = vld [vmem:[#allocation9 + $0xc] sm:$0xf]
    %v442 = vld [vmem:[#allocation9 + $0x10] sm:$0xf]
    %v443 = vld [vmem:[#allocation9 + $0x14] sm:$0xf]
    %v444 = vld [vmem:[#allocation9 + $0x18] sm:$0xf]
    %v445 = vld [vmem:[#allocation9 + $0x1c] sm:$0xf]
    %v446 = vld [vmem:[#allocation9 + $0x20] sm:$0xf]
    %v447 = vld [vmem:[#allocation9 + $0x24] sm:$0xf]
    %v448 = vld [vmem:[#allocation9 + $0x28] sm:$0xf]
    %v449 = vld [vmem:[#allocation9 + $0x2c] sm:$0xf]
    %v450 = vld [vmem:[#allocation9 + $0x30] sm:$0xf]
    %v451 = vld [vmem:[#allocation9 + $0x34] sm:$0xf]
    %v452 = vld [vmem:[#allocation9 + $0x38] sm:$0xf]
    %v453 = vld [vmem:[#allocation9 + $0x3c] sm:$0xf]
    %v454 = vld [vmem:[%s10] sm:$0x1]
    %v456 = vlaneseq
    %v457 = vshrl.u32 %v456, 7
    %v458 = vsub.s32 0, %v457
    %v459 = vrot.slane %v454, %v458
    %v477 = vunpack.c.l.b16 %v438
    %v478 = vunpack.c.l.b16 %v439
    %v479 = vunpack.c.l.b16 %v440
    %v480 = vunpack.c.l.b16 %v441
    %v481 = vunpack.c.l.b16 %v442
    %v482 = vunpack.c.l.b16 %v443
    %v483 = vunpack.c.l.b16 %v444
    %v484 = vunpack.c.l.b16 %v445
    %v485 = vunpack.c.l.b16 %v446
    %v486 = vunpack.c.l.b16 %v447
    %v487 = vunpack.c.l.b16 %v448
    %v488 = vunpack.c.l.b16 %v449
    %v489 = vunpack.c.l.b16 %v450
    %v490 = vunpack.c.l.b16 %v451
    %v491 = vunpack.c.l.b16 %v452
    %v492 = vunpack.c.l.b16 %v453
    %v493 = vpack.c.b16 %v478, %v477
    %v494 = vpack.c.b16 %v480, %v479
    %v495 = vpack.c.b16 %v482, %v481
    %v496 = vpack.c.b16 %v484, %v483
    %v497 = vpack.c.b16 %v486, %v485
    %v498 = vpack.c.b16 %v488, %v487
    %v499 = vpack.c.b16 %v490, %v489
    %v500 = vpack.c.b16 %v492, %v491
    %509 = vmatprep.subr.bf16.mxu0 0
    %510 = vmatpush1.bf16.msra.mxu0 %v500
    %511 = vmatprep.subr.bf16.mxu0 0
    %512 = vmatpush1.bf16.msra.mxu0 %v499
    %513 = vmatprep.subr.bf16.mxu0 0
    %514 = vmatpush1.bf16.msra.mxu0 %v498
    %515 = vmatprep.subr.bf16.mxu0 0
    %516 = vmatpush1.bf16.msra.mxu0 %v497
    %517 = vmatprep.subr.bf16.mxu0 0
    %518 = vmatpush1.bf16.msra.mxu0 %v496
    %519 = vmatprep.subr.bf16.mxu0 0
    %520 = vmatpush1.bf16.msra.mxu0 %v495
    %521 = vmatprep.subr.bf16.mxu0 0
    %522 = vmatpush1.bf16.msra.mxu0 %v494
    %523 = vmatprep.subr.bf16.mxu0 0
    %524 = vmatpush1.bf16.msra.mxu0 %v493
    %525 = vmatprep.subr.bf16.mxu0 0
    %526 = vmatpush2.bf16.msra.mxu0 0
    %527 = vmatprep.subr.bf16.mxu0 0
    %528 = vmatpush2.bf16.msra.mxu0 0
    %529 = vmatprep.subr.bf16.mxu0 0
    %530 = vmatpush2.bf16.msra.mxu0 0
    %531 = vmatprep.subr.bf16.mxu0 0
    %532 = vmatpush2.bf16.msra.mxu0 0
    %533 = vmatprep.subr.bf16.mxu0 0
    %534 = vmatpush2.bf16.msra.mxu0 0
    %535 = vmatprep.subr.bf16.mxu0 0
    %536 = vmatpush2.bf16.msra.mxu0 0
    %537 = vmatprep.subr.bf16.mxu0 0
    %538 = vmatpush2.bf16.msra.mxu0 0
    %539 = vmatprep.subr.bf16.mxu0 0
    %540 = vmatpush2.bf16.msra.mxu0 0
    %541 = vmatprep.mubr.bf16.mxu0 0
    %542 = vmatmul.mubr.bf16.gmra.mxu0 %v437
    %v543 = vpop.f32.mrf.mxu0
    %v544 = vadd.f32 %v459, %v543
    %v545 = vpop.f32.mrf.mxu0
    %v546 = vpop.f32.mrf.mxu0
    %v547 = vadd.f32 %v459, %v546
    %v548 = vpop.f32.mrf.mxu0
    %549 = vdwg.mxu0
    %550 = vadd.xlane.f32.xlu0 %v544
    %v551 = vpop.xlane.xlu0 %550
    %552 = vadd.xlane.f32.xlu0 %v547
    %v553 = vpop.xlane.xlu0 %552
    %v554 = vmul.f32 %v544, %v544
    %v555 = vmul.f32 %v547, %v547
    %556 = vadd.xlane.f32.xlu0 %v554
    %v557 = vpop.xlane.xlu0 %556
    %558 = vadd.xlane.f32.xlu0 %v555
    %v559 = vpop.xlane.xlu0 %558
    %v560 = vmul.f32 %v551, 0.03125
    %v561 = vmul.f32 %v553, 0.03125
    %v562 = vmul.f32 %v557, 0.03125
    %v563 = vmul.f32 %v559, 0.03125
    %v564 = vmul.f32 %v560, %v560
    %v565 = vmul.f32 %v561, %v561
    %v566 = vsub.f32 %v562, %v564
    %v567 = vsub.f32 %v563, %v565
    %v568 = vmax.f32 %v566, 0.0
    %v569 = vmax.f32 %v567, 0.0
    %v570 = vsub.f32 %v544, %v560
    %v571 = vsub.f32 %v547, %v561
    %v572 = vadd.f32 %v568, 1e-05
    %v573 = vadd.f32 %v569, 1e-05
    %v574 = vrsqrt.pop %v572
    %v575 = vrsqrt.pop %v573
    %v576 = vmul.f32 %v570, %v574
    %v577 = vmul.f32 %v571, %v575
    %v578 = vld [vmem:[%s11] sm:$0x1]
    %v580 = vlaneseq
    %v581 = vshrl.u32 %v580, 7
    %v582 = vsub.s32 0, %v581
    %v583 = vrot.slane %v578, %v582
    %v585 = vmul.f32 %v576, %v583
    %v586 = vmul.f32 %v577, %v583
    %v587 = vld [vmem:[%s12] sm:$0x1]
    %v589 = vlaneseq
    %v590 = vshrl.u32 %v589, 7
    %v591 = vsub.s32 0, %v590
    %v592 = vrot.slane %v587, %v591
    %v594 = vadd.f32 %v585, %v592
    %v595 = vadd.f32 %v586, %v592
    %v596 = vmax.f32 %v594, 0.0
    %v597 = vmax.f32 %v595, 0.0
    %v598 = vpack.c.bf16 %v597, %v596
    %v599 = vld [vmem:[%s13] sm:$0x1]
    %v600 = vunpack.c.l.bf16 %v598
    %v601 = vunpack.c.h.bf16 %v598
    %v603 = vlaneseq
    %v604 = vshrl.u32 %v603, 7
    %v605 = vsub.s32 0, %v604
    %v606 = vrot.slane %v599, %v605
    %v608 = vmul.f32 %v600, %v606
    %v609 = vmul.f32 %v601, %v606
    %610 = vadd.xlane.f32.xlu0 %v608
    %v611 = vpop.xlane.xlu0 %610
    %612 = vadd.xlane.f32.xlu0 %v609
    %v613 = vpop.xlane.xlu0 %612
    %s614 = sld [smem:[#allocation2]]
    %v615 = vstv %s614
    %v616 = vadd.f32 %v611, %v615
    %v617 = vadd.f32 %v613, %v615
    %v618 = vxor.u32 %v616, 2147483648
    %v619 = vxor.u32 %v617, 2147483648
    %v620 = vmul.f32 %v618, 1.442695
    %v621 = vpow.pop %v620
    %v622 = vmul.f32 %v619, 1.442695
    %v623 = vpow.pop %v622
    %v624 = vadd.f32 %v621, 1.0
    %v625 = vadd.f32 %v623, 1.0
    %v626 = vrcp.pop %v624
    %v627 = vmul.f32 1.0, %v626
    %v628 = vrcp.pop %v625
    %v629 = vmul.f32 1.0, %v628
    %630 = vst [vmem:[#allocation11] sm:$0xff] %v627
    %631 = vst [vmem:[#allocation11 + $0x8] sm:$0xff] %v629
    // Predicated region
    $region78: #{tpu_custom_call.1} parent=1 // pred_check
      _
    $region79: #{tpu_custom_call.1} parent=1 // pred_check_branch
      %633 = sbr.rel (0) target = $region81
    $region80: #{tpu_custom_call.1} parent=1 // pred_region
      %s635 = ssub.s32 256, 256
      %636 = vsyncadd [#allocation5], %s635
      %s637 = sshll.u32 [#allocation11], 4
      %s638 = int_to_ptr.vmem [resolvable:$true] %s637
      %643 = dma.vmem_to_hbm [thread:$0]  %s638, 256, %s15, [#allocation5], 128, 128, 8
    $region81: #{tpu_custom_call.1} parent=1 // pred_fallthru
      _
    // Predicated region
    $region82: #{tpu_custom_call.1} parent=1 // pred_check
      _
    $region83: #{tpu_custom_call.1} parent=1 // pred_check_branch
      %645 = sbr.rel (0) target = $region85
    $region84: #{tpu_custom_call.1} parent=1 // pred_region
      %646 = dma.done [#allocation5], 256
    $region85: #{tpu_custom_call.1} parent=1 // pred_fallthru
      _
    %647 = vsyncpa [#allocation4], 1
    %648 = vsyncpa [#allocation7], 1
    %649 = vsyncpa [#allocation10], 1
    %650 = vsyncpa [#allocation5], 1

</llo_original>
